<compile_context>
chip_gen: v5e
topology: v5e:2x2
jax: 0.10.0
libtpu: 0.0.40
codegen_flags: <defaults>
</compile_context>

<pallas_src>
import functools

import numpy as np
import jax
import jax.numpy as jnp
from jax.experimental import pallas as pl
from jax.experimental.pallas import tpu as pltpu


# ----------------------------- JPEG constants -------------------------------
_LUMA_QTABLE = np.array([
    [16, 11, 10, 16, 24, 40, 51, 61],
    [12, 12, 14, 19, 26, 58, 60, 55],
    [14, 13, 16, 24, 40, 57, 69, 56],
    [14, 17, 22, 29, 51, 87, 80, 62],
    [18, 22, 37, 56, 68, 109, 103, 77],
    [24, 35, 55, 64, 81, 104, 113, 92],
    [49, 64, 78, 87, 103, 121, 120, 101],
    [72, 92, 95, 98, 112, 100, 103, 99]], dtype=np.float64)

_CHROMA_QTABLE = np.array([
    [17, 18, 24, 47, 99, 99, 99, 99],
    [18, 21, 26, 66, 99, 99, 99, 99],
    [24, 26, 56, 99, 99, 99, 99, 99],
    [47, 66, 99, 99, 99, 99, 99, 99],
    [99, 99, 99, 99, 99, 99, 99, 99],
    [99, 99, 99, 99, 99, 99, 99, 99],
    [99, 99, 99, 99, 99, 99, 99, 99],
    [99, 99, 99, 99, 99, 99, 99, 99]], dtype=np.float64)

_MAX_BLOCK_ROWS = 2048          # packed rows per block-kernel grid step
_VMEM_LIMIT = 32 * 1024 * 1024  # safe on v5e/v6e/v7x (<= physical everywhere)


def _scale_qtable(base, quality):
    """QTableScaler: libjpeg quality scaling of the base tables."""
    quality = int(np.clip(quality, 1, 100))
    scale = 5000 // quality if quality < 50 else 200 - 2 * quality
    q = np.floor((base * scale + 50.0) / 100.0)
    return np.clip(q, 1.0, 255.0)


def _dct_matrix():
    """Orthonormal 8-point DCT-II matrix D[k, n]."""
    k = np.arange(8, dtype=np.float64)[:, None]
    n = np.arange(8, dtype=np.float64)[None, :]
    D = np.cos((2.0 * n + 1.0) * k * np.pi / 16.0) * np.sqrt(2.0 / 8.0)
    D[0, :] = np.sqrt(1.0 / 8.0)
    return D


def _preferred_pack():
    """Blocks per packed row: 4 for 256-wide MXUs (v6/v7), else 2."""
    try:
        kind = jax.devices()[0].device_kind.lower()
    except Exception:  # pragma: no cover
        return 4
    return 4 if ("v6" in kind or "v7" in kind) else 2


def _largest_divisor(n, multiple, cap):
    """Largest d <= cap with d % multiple == 0 and n % d == 0 (n % multiple == 0)."""
    best = multiple
    d = multiple
    while d <= min(n, cap):
        if n % d == 0:
            best = d
        d += multiple
    return best


def _pool_matrices(th, cw):
    """2x2-mean: vertical (th/2, th) left matrix, horizontal (cw, cw/2) right."""
    pv = np.zeros((th // 2, th), np.float32)
    idx = np.arange(th // 2)
    pv[idx, 2 * idx] = 0.5
    pv[idx, 2 * idx + 1] = 0.5
    ph = np.zeros((cw, cw // 2), np.float32)
    jdx = np.arange(cw // 2)
    ph[2 * jdx, jdx] = 0.5
    ph[2 * jdx + 1, jdx] = 0.5
    return pv, ph


def _upsample_matrices(th, cw):
    """Nearest 2x: vertical (th, th/2) left matrix, horizontal (cw/2, cw) right."""
    uv = np.zeros((th, th // 2), np.float32)
    uv[np.arange(th), np.arange(th) // 2] = 1.0
    uh = np.zeros((cw // 2, cw), np.float32)
    uh[np.arange(cw) // 2, np.arange(cw)] = 1.0
    return uv, uh


# ------------------------------ Pallas kernels ------------------------------
def _rgb2ycbcr_ds_kernel(x_ref, pv_ref, ph_ref, y_ref, c_ref):
    """Fused: [0,1]*255 -> RGB2YCbCr (-128 level shift) -> h2v2 downsample
    (2x2 mean via MXU matmuls) -> width dither -> floor (straight-through)."""
    r = x_ref[0, 0] * 255.0
    g = x_ref[0, 1] * 255.0
    b = x_ref[0, 2] * 255.0
    y = 0.299 * r + 0.587 * g + 0.114 * b - 128.0
    cb = -0.168736 * r - 0.331264 * g + 0.5 * b      # (Cb + 128) - 128
    cr = 0.5 * r - 0.418688 * g - 0.081312 * b       # (Cr + 128) - 128
    y_ref[0] = y

    pv = pv_ref[...]                                  # (th/2, th)
    ph = ph_ref[...]                                  # (cw, cw/2)
    w = x_ref.shape[-1]
    cw = ph_ref.shape[0]
    n_chunks = w // cw
    # Dither 0.25/0.5 alternating along the downsampled width, then floor.
    dith = ((jax.lax.broadcasted_iota(jnp.int32, (1, w // 2), 1) % 2) + 1
            ).astype(jnp.float32) * 0.25
    for ci, c_full in enumerate((cb, cr)):
        c_v = jnp.dot(pv, c_full, preferred_element_type=jnp.float32)
        pieces = [
            jnp.dot(c_v[:, k * cw:(k + 1) * cw], ph,
                    preferred_element_type=jnp.float32)
            for k in range(n_chunks)
        ]
        c_ds = pieces[0] if n_chunks == 1 else jnp.concatenate(pieces, axis=-1)
        c_ref[0, ci] = jnp.floor(c_ds + dith)


def _ycbcr2rgb_up_kernel(y_ref, c_ref, uv_ref, uh_ref, o_ref):
    """Fused: nearest 2x chroma upsample (MXU matmuls) -> +128 level un-shift,
    YCbCr2RGB, clamp(0,255), /255, channel concat."""
    y = y_ref[0] + 128.0
    uv = uv_ref[...]                                  # (th, th/2)
    uh = uh_ref[...]                                  # (cw/2, cw)
    half = uh_ref.shape[0]
    n_chunks = c_ref.shape[-1] // half
    ups = []
    for ci in range(2):
        ch = c_ref[0, ci]                             # (th/2, w/2)
        pieces = [
            jnp.dot(ch[:, k * half:(k + 1) * half], uh,
                    preferred_element_type=jnp.float32)
            for k in range(n_chunks)
        ]
        c_h = pieces[0] if n_chunks == 1 else jnp.concatenate(pieces, axis=-1)
        ups.append(jnp.dot(uv, c_h, preferred_element_type=jnp.float32))
    cb, cr = ups
    inv255 = jnp.float32(1.0 / 255.0)
    r = y + 1.402 * cr
    g = y - 0.344136 * cb - 0.714136 * cr
    b = y + 1.772 * cb
    o_ref[0, 0] = jnp.clip(r, 0.0, 255.0) * inv255
    o_ref[0, 1] = jnp.clip(g, 0.0, 255.0) * inv255
    o_ref[0, 2] = jnp.clip(b, 0.0, 255.0) * inv255


def _jpeg_block_kernel(x_ref, ktq_ref, kq_ref, o_ref):
    """DCT + quantize (tables folded into ktq), round, dequantize + IDCT
    (tables folded into kq).  Rows are independent packed 8x8 blocks, so a
    masked partial last grid block is safe."""
    f_q = jnp.round(jnp.dot(x_ref[...], ktq_ref[...],
                            preferred_element_type=jnp.float32))
    o_ref[...] = jnp.dot(f_q, kq_ref[...], preferred_element_type=jnp.float32)


# ------------------------------- helpers ------------------------------------
def _to_packed_blocks(x, pack):
    """[B, H, W] -> [B*(H//8)*(W//8)//pack, 64*pack] (row-major 8x8 blocks)."""
    b, h, w = x.shape
    x = x.reshape(b, h // 8, 8, w // 8, 8)
    x = jnp.transpose(x, (0, 1, 3, 2, 4))
    return x.reshape((b * (h // 8) * (w // 8)) // pack, 64 * pack)


def _from_packed_blocks(xb, b, h, w):
    """Inverse of _to_packed_blocks."""
    x = xb.reshape(b, h // 8, w // 8, 8, 8)
    x = jnp.transpose(x, (0, 1, 3, 2, 4))
    return x.reshape(b, h, w)


def _jpeg_plane_roundtrip(plane, qvec, k_np, pack_pref):
    """DCT -> quantize -> dequantize -> IDCT on a [B, H, W] plane."""
    b, h, w = plane.shape
    nb = b * (h // 8) * (w // 8)
    pack = pack_pref
    while pack > 1 and nb % pack:
        pack //= 2
    lane = 64 * pack

    q_t = np.tile(qvec.reshape(-1), pack)                   # (lane,)
    kp = np.kron(np.eye(pack), k_np)                        # (lane, lane)
    ktq = jnp.asarray(kp.T / q_t[None, :], jnp.float32)     # DCT + 1/q folded
    kq = jnp.asarray(kp * q_t[:, None], jnp.float32)        # q + IDCT folded

    blocks = _to_packed_blocks(plane, pack)                 # (nbp, lane)
    nbp = blocks.shape[0]
    if nbp <= _MAX_BLOCK_ROWS:
        if nbp >= 16:
            # >=2 grid steps so v7x can shard the parallel axis across both TCs.
            tile = (((nbp + 1) // 2) + 7) // 8 * 8
        else:
            tile = nbp
    else:
        tile = _MAX_BLOCK_ROWS
    grid = pl.cdiv(nbp, tile)

    out = pl.pallas_call(
        _jpeg_block_kernel,
        out_shape=jax.ShapeDtypeStruct((nbp, lane), jnp.float32),
        grid=(grid,),
        in_specs=[
            pl.BlockSpec((tile, lane), lambda i: (i, 0)),
            pl.BlockSpec((lane, lane), lambda i: (0, 0)),
            pl.BlockSpec((lane, lane), lambda i: (0, 0)),
        ],
        out_specs=pl.BlockSpec((tile, lane), lambda i: (i, 0)),
        compiler_params=pltpu.CompilerParams(
            dimension_semantics=("parallel",),
            vmem_limit_bytes=_VMEM_LIMIT),
    )(blocks, ktq, kq)
    return _from_packed_blocks(out, b, h, w)


# ------------------------------- forward ------------------------------------
@functools.partial(jax.jit, static_argnums=(1, 2))
def _ptjpeg_jit(im, quality, pack_pref):
    n, c, h, w = im.shape
    assert c == 3, "expected [N, 3, H, W]"
    assert h % 16 == 0 and w % 16 == 0, "h2v2 needs H, W divisible by 16"

    d = _dct_matrix()
    k_np = np.kron(d, d)                                    # (64, 64)
    luma_q = _scale_qtable(_LUMA_QTABLE, quality).reshape(-1)
    chroma_q = _scale_qtable(_CHROMA_QTABLE, quality).reshape(-1)

    x = im.astype(jnp.float32)

    # Row-strip height (~64K pixels/step, multiple of 16, divides H) and the
    # horizontal pooling chunk width (multiple of 16, divides W, <= 256).
    th_cap = max(16, min(128, (65536 // max(w, 1)) // 16 * 16))
    th = _largest_divisor(h, 16, th_cap)
    cw = _largest_divisor(w, 16, 256)
    row_grid = h // th

    pv, ph = _pool_matrices(th, cw)
    uv, uh = _upsample_matrices(th, cw)

    # --- RGB -> YCbCr (-128) + fused h2v2 downsample + dither + floor --------
    y, cbcr_ds = pl.pallas_call(
        _rgb2ycbcr_ds_kernel,
        out_shape=(jax.ShapeDtypeStruct((n, h, w), jnp.float32),
                   jax.ShapeDtypeStruct((n, 2, h // 2, w // 2), jnp.float32)),
        grid=(n, row_grid),
        in_specs=[
            pl.BlockSpec((1, 3, th, w), lambda i, j: (i, 0, j, 0)),
            pl.BlockSpec((th // 2, th), lambda i, j: (0, 0)),
            pl.BlockSpec((cw, cw // 2), lambda i, j: (0, 0)),
        ],
        out_specs=(
            pl.BlockSpec((1, th, w), lambda i, j: (i, j, 0)),
            pl.BlockSpec((1, 2, th // 2, w // 2), lambda i, j: (i, 0, j, 0)),
        ),
        compiler_params=pltpu.CompilerParams(
            dimension_semantics=("parallel", "parallel"),
            vmem_limit_bytes=_VMEM_LIMIT),
    )(x, jnp.asarray(pv), jnp.asarray(ph))

    # TODO(synk): the reference forward loads aux_res/ttt_{cb,cr}_ds.csv only
    # to compute unused cb_error/cr_error locals; skipped (no file I/O).

    # --- DCT -> quantize -> dequantize -> IDCT (Pallas, MXU) -----------------
    hc, wc = h // 2, w // 2
    y_rec = _jpeg_plane_roundtrip(y, luma_q, k_np, pack_pref)
    c_rec = _jpeg_plane_roundtrip(
        cbcr_ds.reshape(n * 2, hc, wc), chroma_q, k_np,
        pack_pref).reshape(n, 2, hc, wc)

    # --- YCbCr -> RGB with fused 2x nearest chroma upsample ------------------
    rgb = pl.pallas_call(
        _ycbcr2rgb_up_kernel,
        out_shape=jax.ShapeDtypeStruct((n, 3, h, w), jnp.float32),
        grid=(n, row_grid),
        in_specs=[
            pl.BlockSpec((1, th, w), lambda i, j: (i, j, 0)),
            pl.BlockSpec((1, 2, th // 2, w // 2), lambda i, j: (i, 0, j, 0)),
            pl.BlockSpec((th, th // 2), lambda i, j: (0, 0)),
            pl.BlockSpec((cw // 2, cw), lambda i, j: (0, 0)),
        ],
        out_specs=pl.BlockSpec((1, 3, th, w), lambda i, j: (i, 0, j, 0)),
        compiler_params=pltpu.CompilerParams(
            dimension_semantics=("parallel", "parallel"),
            vmem_limit_bytes=_VMEM_LIMIT),
    )(y_rec, c_rec, jnp.asarray(uv), jnp.asarray(uh))
    return rgb


def ptjpeg_forward(im, quality=75):
    """PTJPEG.forward: im in [0, 1], NCHW, 3 channels, H & W % 16 == 0."""
    assert im.ndim == 4 and im.shape[1] == 3, "expected [N, 3, H, W]"
    return _ptjpeg_jit(im, int(quality), _preferred_pack())


if __name__ == "__main__":
    key = jax.random.PRNGKey(0)
    im = jax.random.uniform(key, (2, 3, 32, 32), dtype=jnp.float32)
    out = ptjpeg_forward(im, quality=75)
    jax.block_until_ready(out)
    assert out.shape == im.shape and out.dtype == jnp.float32
    assert bool(jnp.all(jnp.isfinite(out)))
    assert bool(jnp.all((out >= 0.0) & (out <= 1.0)))
    assert float(jnp.mean(jnp.abs(out - im))) < 0.5

    # Flat gray image: JPEG round-trip should be near-exact (DC only).
    flat = jnp.full((1, 3, 32, 32), 0.5, dtype=jnp.float32)
    flat_out = ptjpeg_forward(flat, quality=75)
    jax.block_until_ready(flat_out)
    assert float(jnp.max(jnp.abs(flat_out - flat))) < 0.03
    print("KERNEL_OK")
</pallas_src>

<mosaic_0001>
module attributes {stable_mosaic.version = 11 : i64} {
  func.func @_rgb2ycbcr_ds_kernel(%arg0: i32, %arg1: i32, %arg2: memref<1x3x32x32xf32, #tpu.memory_space<vmem>>, %arg3: memref<16x32xf32, #tpu.memory_space<vmem>>, %arg4: memref<32x16xf32, #tpu.memory_space<vmem>>, %arg5: memref<1x32x32xf32, #tpu.memory_space<vmem>>, %arg6: memref<1x2x16x16xf32, #tpu.memory_space<vmem>>) attributes {dimension_semantics = [#tpu.dimension_semantics<parallel>, #tpu.dimension_semantics<parallel>], iteration_bounds = array<i64: 2, 1>, scalar_prefetch = 0 : i64, scratch_operands = 0 : i64, tpu.core_type = #tpu.core_type<tc>, window_params = [{transform_indices = @transform_0, window_bounds = array<i64: 1, 3, 32, 32>}, {pipeline_mode = #tpu.pipeline_mode<synchronous>, transform_indices = @transform_1, window_bounds = array<i64: 16, 32>}, {pipeline_mode = #tpu.pipeline_mode<synchronous>, transform_indices = @transform_2, window_bounds = array<i64: 32, 16>}, {transform_indices = @transform_3, window_bounds = array<i64: 1, 32, 32>}, {transform_indices = @transform_4, window_bounds = array<i64: 1, 2, 16, 16>}]} {
    %c0 = arith.constant 0 : index
    %c0_0 = arith.constant 0 : index
    %c0_1 = arith.constant 0 : index
    %c0_2 = arith.constant 0 : index
    %0 = vector.load %arg2[%c0, %c0_0, %c0_1, %c0_2] : memref<1x3x32x32xf32, #tpu.memory_space<vmem>>, vector<1x1x32x32xf32>
    %1 = vector.shape_cast %0 : vector<1x1x32x32xf32> to vector<32x32xf32>
    %cst = arith.constant 2.550000e+02 : f32
    %2 = vector.broadcast %cst : f32 to vector<32x32xf32>
    %3 = arith.mulf %1, %2 : vector<32x32xf32>
    %c0_3 = arith.constant 0 : index
    %c1 = arith.constant 1 : index
    %c0_4 = arith.constant 0 : index
    %c0_5 = arith.constant 0 : index
    %4 = vector.load %arg2[%c0_3, %c1, %c0_4, %c0_5] : memref<1x3x32x32xf32, #tpu.memory_space<vmem>>, vector<1x1x32x32xf32>
    %5 = vector.shape_cast %4 : vector<1x1x32x32xf32> to vector<32x32xf32>
    %cst_6 = arith.constant 2.550000e+02 : f32
    %6 = vector.broadcast %cst_6 : f32 to vector<32x32xf32>
    %7 = arith.mulf %5, %6 : vector<32x32xf32>
    %c0_7 = arith.constant 0 : index
    %c2 = arith.constant 2 : index
    %c0_8 = arith.constant 0 : index
    %c0_9 = arith.constant 0 : index
    %8 = vector.load %arg2[%c0_7, %c2, %c0_8, %c0_9] : memref<1x3x32x32xf32, #tpu.memory_space<vmem>>, vector<1x1x32x32xf32>
    %9 = vector.shape_cast %8 : vector<1x1x32x32xf32> to vector<32x32xf32>
    %cst_10 = arith.constant 2.550000e+02 : f32
    %10 = vector.broadcast %cst_10 : f32 to vector<32x32xf32>
    %11 = arith.mulf %9, %10 : vector<32x32xf32>
    %cst_11 = arith.constant 2.990000e-01 : f32
    %12 = vector.broadcast %cst_11 : f32 to vector<32x32xf32>
    %13 = arith.mulf %12, %3 : vector<32x32xf32>
    %cst_12 = arith.constant 5.870000e-01 : f32
    %14 = vector.broadcast %cst_12 : f32 to vector<32x32xf32>
    %15 = arith.mulf %14, %7 : vector<32x32xf32>
    %16 = arith.addf %13, %15 : vector<32x32xf32>
    %cst_13 = arith.constant 1.140000e-01 : f32
    %17 = vector.broadcast %cst_13 : f32 to vector<32x32xf32>
    %18 = arith.mulf %17, %11 : vector<32x32xf32>
    %19 = arith.addf %16, %18 : vector<32x32xf32>
    %cst_14 = arith.constant 1.280000e+02 : f32
    %20 = vector.broadcast %cst_14 : f32 to vector<32x32xf32>
    %21 = arith.subf %19, %20 : vector<32x32xf32>
    %cst_15 = arith.constant -1.687360e-01 : f32
    %22 = vector.broadcast %cst_15 : f32 to vector<32x32xf32>
    %23 = arith.mulf %22, %3 : vector<32x32xf32>
    %cst_16 = arith.constant 3.312640e-01 : f32
    %24 = vector.broadcast %cst_16 : f32 to vector<32x32xf32>
    %25 = arith.mulf %24, %7 : vector<32x32xf32>
    %26 = arith.subf %23, %25 : vector<32x32xf32>
    %cst_17 = arith.constant 5.000000e-01 : f32
    %27 = vector.broadcast %cst_17 : f32 to vector<32x32xf32>
    %28 = arith.mulf %27, %11 : vector<32x32xf32>
    %29 = arith.addf %26, %28 : vector<32x32xf32>
    %cst_18 = arith.constant 5.000000e-01 : f32
    %30 = vector.broadcast %cst_18 : f32 to vector<32x32xf32>
    %31 = arith.mulf %30, %3 : vector<32x32xf32>
    %cst_19 = arith.constant 4.186880e-01 : f32
    %32 = vector.broadcast %cst_19 : f32 to vector<32x32xf32>
    %33 = arith.mulf %32, %7 : vector<32x32xf32>
    %34 = arith.subf %31, %33 : vector<32x32xf32>
    %cst_20 = arith.constant 8.131200e-02 : f32
    %35 = vector.broadcast %cst_20 : f32 to vector<32x32xf32>
    %36 = arith.mulf %35, %11 : vector<32x32xf32>
    %37 = arith.subf %34, %36 : vector<32x32xf32>
    %c0_21 = arith.constant 0 : index
    %c0_22 = arith.constant 0 : index
    %c0_23 = arith.constant 0 : index
    %38 = vector.load %arg5[%c0_21, %c0_22, %c0_23] : memref<1x32x32xf32, #tpu.memory_space<vmem>>, vector<1x32x32xf32>
    %39 = vector.shape_cast %38 : vector<1x32x32xf32> to vector<32x32xf32>
    %40 = vector.shape_cast %21 : vector<32x32xf32> to vector<1x32x32xf32>
    tpu.vector_store %arg5[%c0_21, %c0_22, %c0_23], %40 {strides = array<i32>} : memref<1x32x32xf32, #tpu.memory_space<vmem>>, vector<1x32x32xf32>,
    %c0_24 = arith.constant 0 : index
    %c0_25 = arith.constant 0 : index
    %41 = vector.load %arg3[%c0_24, %c0_25] : memref<16x32xf32, #tpu.memory_space<vmem>>, vector<16x32xf32>
    %c0_26 = arith.constant 0 : index
    %c0_27 = arith.constant 0 : index
    %42 = vector.load %arg4[%c0_26, %c0_27] : memref<32x16xf32, #tpu.memory_space<vmem>>, vector<32x16xf32>
    %43 = tpu.iota {dimensions = array<i32: 1>} : vector<1x16xi32>
    %c2_i32 = arith.constant 2 : i32
    %c0_i32 = arith.constant 0 : i32
    %44 = arith.cmpi eq, %c2_i32, %c0_i32 : i32
    %c1_i32 = arith.constant 1 : i32
    %45 = arith.select %44, %c1_i32, %c2_i32 : i32
    %46 = vector.broadcast %45 : i32 to vector<1x16xi32>
    %47 = arith.remsi %43, %46 : vector<1x16xi32>
    %c0_i32_28 = arith.constant 0 : i32
    %48 = vector.broadcast %c0_i32_28 : i32 to vector<1x16xi32>
    %49 = arith.cmpi ne, %47, %48 : vector<1x16xi32>
    %c0_i32_29 = arith.constant 0 : i32
    %50 = vector.broadcast %c0_i32_29 : i32 to vector<1x16xi32>
    %51 = arith.cmpi slt, %47, %50 : vector<1x16xi32>
    %c0_i32_30 = arith.constant 0 : i32
    %52 = arith.cmpi slt, %45, %c0_i32_30 : i32
    %53 = vector.broadcast %52 : i1 to vector<1x16xi1>
    %54 = vector.broadcast %53 : vector<1x16xi1> to vector<1x16xi1>
    %55 = arith.xori %51, %54 : vector<1x16xi1>
    %56 = arith.andi %55, %49 : vector<1x16xi1>
    %57 = vector.broadcast %45 : i32 to vector<1x16xi32>
    %58 = arith.addi %47, %57 : vector<1x16xi32>
    %59 = arith.select %56, %58, %47 : vector<1x16xi1>, vector<1x16xi32>
    %c1_i32_31 = arith.constant 1 : i32
    %60 = vector.broadcast %c1_i32_31 : i32 to vector<1x16xi32>
    %61 = arith.addi %59, %60 : vector<1x16xi32>
    %62 = arith.sitofp %61 : vector<1x16xi32> to vector<1x16xf32>
    %cst_32 = arith.constant 2.500000e-01 : f32
    %63 = vector.broadcast %cst_32 : f32 to vector<1x16xf32>
    %64 = arith.mulf %62, %63 : vector<1x16xf32>
    %cst_33 = arith.constant dense<0.000000e+00> : vector<16x32xf32>
    %65 = tpu.matmul %41, %29, %cst_33 {dimension_numbers = #tpu.dot_dimension_numbers<[1], [0], [0], [1], [0, 0, 1, 1], [], []>} : vector<16x32xf32>, vector<32x32xf32>, vector<16x32xf32> -> vector<16x32xf32>
    %cst_34 = arith.constant dense<0.000000e+00> : vector<16x16xf32>
    %66 = tpu.matmul %65, %42, %cst_34 {dimension_numbers = #tpu.dot_dimension_numbers<[1], [0], [0], [1], [0, 0, 1, 1], [], []>} : vector<16x32xf32>, vector<32x16xf32>, vector<16x16xf32> -> vector<16x16xf32>
    %67 = vector.broadcast %64 : vector<1x16xf32> to vector<16x16xf32>
    %68 = arith.addf %66, %67 : vector<16x16xf32>
    %69 = math.floor %68 : vector<16x16xf32>
    %c0_35 = arith.constant 0 : index
    %c0_36 = arith.constant 0 : index
    %c0_37 = arith.constant 0 : index
    %c0_38 = arith.constant 0 : index
    %70 = vector.load %arg6[%c0_35, %c0_36, %c0_37, %c0_38] : memref<1x2x16x16xf32, #tpu.memory_space<vmem>>, vector<1x1x16x16xf32>
    %71 = vector.shape_cast %70 : vector<1x1x16x16xf32> to vector<16x16xf32>
    %72 = vector.shape_cast %69 : vector<16x16xf32> to vector<1x1x16x16xf32>
    tpu.vector_store %arg6[%c0_35, %c0_36, %c0_37, %c0_38], %72 {strides = array<i32>} : memref<1x2x16x16xf32, #tpu.memory_space<vmem>>, vector<1x1x16x16xf32>,
    %cst_39 = arith.constant dense<0.000000e+00> : vector<16x32xf32>
    %73 = tpu.matmul %41, %37, %cst_39 {dimension_numbers = #tpu.dot_dimension_numbers<[1], [0], [0], [1], [0, 0, 1, 1], [], []>} : vector<16x32xf32>, vector<32x32xf32>, vector<16x32xf32> -> vector<16x32xf32>
    %cst_40 = arith.constant dense<0.000000e+00> : vector<16x16xf32>
    %74 = tpu.matmul %73, %42, %cst_40 {dimension_numbers = #tpu.dot_dimension_numbers<[1], [0], [0], [1], [0, 0, 1, 1], [], []>} : vector<16x32xf32>, vector<32x16xf32>, vector<16x16xf32> -> vector<16x16xf32>
    %75 = vector.broadcast %64 : vector<1x16xf32> to vector<16x16xf32>
    %76 = arith.addf %74, %75 : vector<16x16xf32>
    %77 = math.floor %76 : vector<16x16xf32>
    %c0_41 = arith.constant 0 : index
    %c1_42 = arith.constant 1 : index
    %c0_43 = arith.constant 0 : index
    %c0_44 = arith.constant 0 : index
    %78 = vector.load %arg6[%c0_41, %c1_42, %c0_43, %c0_44] : memref<1x2x16x16xf32, #tpu.memory_space<vmem>>, vector<1x1x16x16xf32>
    %79 = vector.shape_cast %78 : vector<1x1x16x16xf32> to vector<16x16xf32>
    %80 = vector.shape_cast %77 : vector<16x16xf32> to vector<1x1x16x16xf32>
    tpu.vector_store %arg6[%c0_41, %c1_42, %c0_43, %c0_44], %80 {strides = array<i32>} : memref<1x2x16x16xf32, #tpu.memory_space<vmem>>, vector<1x1x16x16xf32>,
    return
  }
  func.func @transform_0(%arg0: i32, %arg1: i32) -> (i32, i32, i32, i32) {
    %c0_i32 = arith.constant 0 : i32
    %c0_i32_0 = arith.constant 0 : i32
    %c0_i32_1 = arith.constant 0 : i32
    return %arg0, %c0_i32, %arg1, %c0_i32_0 : i32, i32, i32, i32
  }
  func.func @transform_1(%arg0: i32, %arg1: i32) -> (i32, i32) {
    %c0_i32 = arith.constant 0 : i32
    %c0_i32_0 = arith.constant 0 : i32
    %c0_i32_1 = arith.constant 0 : i32
    return %c0_i32, %c0_i32_0 : i32, i32
  }
  func.func @transform_2(%arg0: i32, %arg1: i32) -> (i32, i32) {
    %c0_i32 = arith.constant 0 : i32
    %c0_i32_0 = arith.constant 0 : i32
    %c0_i32_1 = arith.constant 0 : i32
    return %c0_i32, %c0_i32_0 : i32, i32
  }
  func.func @transform_3(%arg0: i32, %arg1: i32) -> (i32, i32, i32) {
    %c0_i32 = arith.constant 0 : i32
    %c0_i32_0 = arith.constant 0 : i32
    return %arg0, %arg1, %c0_i32 : i32, i32, i32
  }
  func.func @transform_4(%arg0: i32, %arg1: i32) -> (i32, i32, i32, i32) {
    %c0_i32 = arith.constant 0 : i32
    %c0_i32_0 = arith.constant 0 : i32
    %c0_i32_1 = arith.constant 0 : i32
    return %arg0, %c0_i32, %arg1, %c0_i32_0 : i32, i32, i32, i32
  }
}

module attributes {stable_mosaic.version = 11 : i64} {
  func.func @_jpeg_block_kernel(%arg0: i32, %arg1: memref<8x128xf32, #tpu.memory_space<vmem>>, %arg2: memref<128x128xf32, #tpu.memory_space<vmem>>, %arg3: memref<128x128xf32, #tpu.memory_space<vmem>>, %arg4: memref<8x128xf32, #tpu.memory_space<vmem>>) attributes {dimension_semantics = [#tpu.dimension_semantics<parallel>], iteration_bounds = array<i64: 1>, scalar_prefetch = 0 : i64, scratch_operands = 0 : i64, tpu.core_type = #tpu.core_type<tc>, window_params = [{transform_indices = @transform_0, window_bounds = array<i64: 8, 128>}, {pipeline_mode = #tpu.pipeline_mode<synchronous>, transform_indices = @transform_1, window_bounds = array<i64: 128, 128>}, {pipeline_mode = #tpu.pipeline_mode<synchronous>, transform_indices = @transform_2, window_bounds = array<i64: 128, 128>}, {transform_indices = @transform_3, window_bounds = array<i64: 8, 128>}]} {
    %c0 = arith.constant 0 : index
    %c0_0 = arith.constant 0 : index
    %0 = vector.load %arg1[%c0, %c0_0] : memref<8x128xf32, #tpu.memory_space<vmem>>, vector<8x128xf32>
    %c0_1 = arith.constant 0 : index
    %c0_2 = arith.constant 0 : index
    %1 = vector.load %arg2[%c0_1, %c0_2] : memref<128x128xf32, #tpu.memory_space<vmem>>, vector<128x128xf32>
    %cst = arith.constant dense<0.000000e+00> : vector<8x128xf32>
    %2 = tpu.matmul %0, %1, %cst {dimension_numbers = #tpu.dot_dimension_numbers<[1], [0], [0], [1], [0, 0, 1, 1], [], []>} : vector<8x128xf32>, vector<128x128xf32>, vector<8x128xf32> -> vector<8x128xf32>
    %3 = math.roundeven %2 : vector<8x128xf32>
    %c0_3 = arith.constant 0 : index
    %c0_4 = arith.constant 0 : index
    %4 = vector.load %arg3[%c0_3, %c0_4] : memref<128x128xf32, #tpu.memory_space<vmem>>, vector<128x128xf32>
    %cst_5 = arith.constant dense<0.000000e+00> : vector<8x128xf32>
    %5 = tpu.matmul %3, %4, %cst_5 {dimension_numbers = #tpu.dot_dimension_numbers<[1], [0], [0], [1], [0, 0, 1, 1], [], []>} : vector<8x128xf32>, vector<128x128xf32>, vector<8x128xf32> -> vector<8x128xf32>
    %c0_6 = arith.constant 0 : index
    %c0_7 = arith.constant 0 : index
    %6 = vector.load %arg4[%c0_6, %c0_7] : memref<8x128xf32, #tpu.memory_space<vmem>>, vector<8x128xf32>
    tpu.vector_store %arg4[%c0_6, %c0_7], %5 {strides = array<i32>} : memref<8x128xf32, #tpu.memory_space<vmem>>, vector<8x128xf32>,
    return
  }
  func.func @transform_0(%arg0: i32) -> (i32, i32) {
    %c0_i32 = arith.constant 0 : i32
    %c0_i32_0 = arith.constant 0 : i32
    return %arg0, %c0_i32 : i32, i32
  }
  func.func @transform_1(%arg0: i32) -> (i32, i32) {
    %c0_i32 = arith.constant 0 : i32
    %c0_i32_0 = arith.constant 0 : i32
    %c0_i32_1 = arith.constant 0 : i32
    return %c0_i32, %c0_i32_0 : i32, i32
  }
  func.func @transform_2(%arg0: i32) -> (i32, i32) {
    %c0_i32 = arith.constant 0 : i32
    %c0_i32_0 = arith.constant 0 : i32
    %c0_i32_1 = arith.constant 0 : i32
    return %c0_i32, %c0_i32_0 : i32, i32
  }
  func.func @transform_3(%arg0: i32) -> (i32, i32) {
    %c0_i32 = arith.constant 0 : i32
    %c0_i32_0 = arith.constant 0 : i32
    return %arg0, %c0_i32 : i32, i32
  }
}

module attributes {stable_mosaic.version = 11 : i64} {
  func.func @_jpeg_block_kernel(%arg0: i32, %arg1: memref<8x128xf32, #tpu.memory_space<vmem>>, %arg2: memref<128x128xf32, #tpu.memory_space<vmem>>, %arg3: memref<128x128xf32, #tpu.memory_space<vmem>>, %arg4: memref<8x128xf32, #tpu.memory_space<vmem>>) attributes {dimension_semantics = [#tpu.dimension_semantics<parallel>], iteration_bounds = array<i64: 2>, scalar_prefetch = 0 : i64, scratch_operands = 0 : i64, tpu.core_type = #tpu.core_type<tc>, window_params = [{transform_indices = @transform_0, window_bounds = array<i64: 8, 128>}, {pipeline_mode = #tpu.pipeline_mode<synchronous>, transform_indices = @transform_1, window_bounds = array<i64: 128, 128>}, {pipeline_mode = #tpu.pipeline_mode<synchronous>, transform_indices = @transform_2, window_bounds = array<i64: 128, 128>}, {transform_indices = @transform_3, window_bounds = array<i64: 8, 128>}]} {
    %c0 = arith.constant 0 : index
    %c0_0 = arith.constant 0 : index
    %0 = vector.load %arg1[%c0, %c0_0] : memref<8x128xf32, #tpu.memory_space<vmem>>, vector<8x128xf32>
    %c0_1 = arith.constant 0 : index
    %c0_2 = arith.constant 0 : index
    %1 = vector.load %arg2[%c0_1, %c0_2] : memref<128x128xf32, #tpu.memory_space<vmem>>, vector<128x128xf32>
    %cst = arith.constant dense<0.000000e+00> : vector<8x128xf32>
    %2 = tpu.matmul %0, %1, %cst {dimension_numbers = #tpu.dot_dimension_numbers<[1], [0], [0], [1], [0, 0, 1, 1], [], []>} : vector<8x128xf32>, vector<128x128xf32>, vector<8x128xf32> -> vector<8x128xf32>
    %3 = math.roundeven %2 : vector<8x128xf32>
    %c0_3 = arith.constant 0 : index
    %c0_4 = arith.constant 0 : index
    %4 = vector.load %arg3[%c0_3, %c0_4] : memref<128x128xf32, #tpu.memory_space<vmem>>, vector<128x128xf32>
    %cst_5 = arith.constant dense<0.000000e+00> : vector<8x128xf32>
    %5 = tpu.matmul %3, %4, %cst_5 {dimension_numbers = #tpu.dot_dimension_numbers<[1], [0], [0], [1], [0, 0, 1, 1], [], []>} : vector<8x128xf32>, vector<128x128xf32>, vector<8x128xf32> -> vector<8x128xf32>
    %c0_6 = arith.constant 0 : index
    %c0_7 = arith.constant 0 : index
    %6 = vector.load %arg4[%c0_6, %c0_7] : memref<8x128xf32, #tpu.memory_space<vmem>>, vector<8x128xf32>
    tpu.vector_store %arg4[%c0_6, %c0_7], %5 {strides = array<i32>} : memref<8x128xf32, #tpu.memory_space<vmem>>, vector<8x128xf32>,
    return
  }
  func.func @transform_0(%arg0: i32) -> (i32, i32) {
    %c0_i32 = arith.constant 0 : i32
    %c0_i32_0 = arith.constant 0 : i32
    return %arg0, %c0_i32 : i32, i32
  }
  func.func @transform_1(%arg0: i32) -> (i32, i32) {
    %c0_i32 = arith.constant 0 : i32
    %c0_i32_0 = arith.constant 0 : i32
    %c0_i32_1 = arith.constant 0 : i32
    return %c0_i32, %c0_i32_0 : i32, i32
  }
  func.func @transform_2(%arg0: i32) -> (i32, i32) {
    %c0_i32 = arith.constant 0 : i32
    %c0_i32_0 = arith.constant 0 : i32
    %c0_i32_1 = arith.constant 0 : i32
    return %c0_i32, %c0_i32_0 : i32, i32
  }
  func.func @transform_3(%arg0: i32) -> (i32, i32) {
    %c0_i32 = arith.constant 0 : i32
    %c0_i32_0 = arith.constant 0 : i32
    return %arg0, %c0_i32 : i32, i32
  }
}

module attributes {stable_mosaic.version = 11 : i64} {
  func.func @_ycbcr2rgb_up_kernel(%arg0: i32, %arg1: i32, %arg2: memref<1x32x32xf32, #tpu.memory_space<vmem>>, %arg3: memref<1x2x16x16xf32, #tpu.memory_space<vmem>>, %arg4: memref<32x16xf32, #tpu.memory_space<vmem>>, %arg5: memref<16x32xf32, #tpu.memory_space<vmem>>, %arg6: memref<1x3x32x32xf32, #tpu.memory_space<vmem>>) attributes {dimension_semantics = [#tpu.dimension_semantics<parallel>, #tpu.dimension_semantics<parallel>], iteration_bounds = array<i64: 2, 1>, scalar_prefetch = 0 : i64, scratch_operands = 0 : i64, tpu.core_type = #tpu.core_type<tc>, window_params = [{transform_indices = @transform_0, window_bounds = array<i64: 1, 32, 32>}, {transform_indices = @transform_1, window_bounds = array<i64: 1, 2, 16, 16>}, {pipeline_mode = #tpu.pipeline_mode<synchronous>, transform_indices = @transform_2, window_bounds = array<i64: 32, 16>}, {pipeline_mode = #tpu.pipeline_mode<synchronous>, transform_indices = @transform_3, window_bounds = array<i64: 16, 32>}, {transform_indices = @transform_4, window_bounds = array<i64: 1, 3, 32, 32>}]} {
    %c0 = arith.constant 0 : index
    %c0_0 = arith.constant 0 : index
    %c0_1 = arith.constant 0 : index
    %0 = vector.load %arg2[%c0, %c0_0, %c0_1] : memref<1x32x32xf32, #tpu.memory_space<vmem>>, vector<1x32x32xf32>
    %1 = vector.shape_cast %0 : vector<1x32x32xf32> to vector<32x32xf32>
    %cst = arith.constant 1.280000e+02 : f32
    %2 = vector.broadcast %cst : f32 to vector<32x32xf32>
    %3 = arith.addf %1, %2 : vector<32x32xf32>
    %c0_2 = arith.constant 0 : index
    %c0_3 = arith.constant 0 : index
    %4 = vector.load %arg4[%c0_2, %c0_3] : memref<32x16xf32, #tpu.memory_space<vmem>>, vector<32x16xf32>
    %c0_4 = arith.constant 0 : index
    %c0_5 = arith.constant 0 : index
    %5 = vector.load %arg5[%c0_4, %c0_5] : memref<16x32xf32, #tpu.memory_space<vmem>>, vector<16x32xf32>
    %c0_6 = arith.constant 0 : index
    %c0_7 = arith.constant 0 : index
    %c0_8 = arith.constant 0 : index
    %c0_9 = arith.constant 0 : index
    %6 = vector.load %arg3[%c0_6, %c0_7, %c0_8, %c0_9] : memref<1x2x16x16xf32, #tpu.memory_space<vmem>>, vector<1x1x16x16xf32>
    %7 = vector.shape_cast %6 : vector<1x1x16x16xf32> to vector<16x16xf32>
    %cst_10 = arith.constant dense<0.000000e+00> : vector<16x32xf32>
    %8 = tpu.matmul %7, %5, %cst_10 {dimension_numbers = #tpu.dot_dimension_numbers<[1], [0], [0], [1], [0, 0, 1, 1], [], []>} : vector<16x16xf32>, vector<16x32xf32>, vector<16x32xf32> -> vector<16x32xf32>
    %cst_11 = arith.constant dense<0.000000e+00> : vector<32x32xf32>
    %9 = tpu.matmul %4, %8, %cst_11 {dimension_numbers = #tpu.dot_dimension_numbers<[1], [0], [0], [1], [0, 0, 1, 1], [], []>} : vector<32x16xf32>, vector<16x32xf32>, vector<32x32xf32> -> vector<32x32xf32>
    %c0_12 = arith.constant 0 : index
    %c1 = arith.constant 1 : index
    %c0_13 = arith.constant 0 : index
    %c0_14 = arith.constant 0 : index
    %10 = vector.load %arg3[%c0_12, %c1, %c0_13, %c0_14] : memref<1x2x16x16xf32, #tpu.memory_space<vmem>>, vector<1x1x16x16xf32>
    %11 = vector.shape_cast %10 : vector<1x1x16x16xf32> to vector<16x16xf32>
    %cst_15 = arith.constant dense<0.000000e+00> : vector<16x32xf32>
    %12 = tpu.matmul %11, %5, %cst_15 {dimension_numbers = #tpu.dot_dimension_numbers<[1], [0], [0], [1], [0, 0, 1, 1], [], []>} : vector<16x16xf32>, vector<16x32xf32>, vector<16x32xf32> -> vector<16x32xf32>
    %cst_16 = arith.constant dense<0.000000e+00> : vector<32x32xf32>
    %13 = tpu.matmul %4, %12, %cst_16 {dimension_numbers = #tpu.dot_dimension_numbers<[1], [0], [0], [1], [0, 0, 1, 1], [], []>} : vector<32x16xf32>, vector<16x32xf32>, vector<32x32xf32> -> vector<32x32xf32>
    %cst_17 = arith.constant 1.402000e+00 : f32
    %14 = vector.broadcast %cst_17 : f32 to vector<32x32xf32>
    %15 = arith.mulf %14, %13 : vector<32x32xf32>
    %16 = arith.addf %3, %15 : vector<32x32xf32>
    %cst_18 = arith.constant 3.441360e-01 : f32
    %17 = vector.broadcast %cst_18 : f32 to vector<32x32xf32>
    %18 = arith.mulf %17, %9 : vector<32x32xf32>
    %19 = arith.subf %3, %18 : vector<32x32xf32>
    %cst_19 = arith.constant 7.141360e-01 : f32
    %20 = vector.broadcast %cst_19 : f32 to vector<32x32xf32>
    %21 = arith.mulf %20, %13 : vector<32x32xf32>
    %22 = arith.subf %19, %21 : vector<32x32xf32>
    %cst_20 = arith.constant 1.772000e+00 : f32
    %23 = vector.broadcast %cst_20 : f32 to vector<32x32xf32>
    %24 = arith.mulf %23, %9 : vector<32x32xf32>
    %25 = arith.addf %3, %24 : vector<32x32xf32>
    %cst_21 = arith.constant 0.000000e+00 : f32
    %cst_22 = arith.constant 2.550000e+02 : f32
    %26 = vector.broadcast %cst_21 : f32 to vector<32x32xf32>
    %27 = arith.maximumf %26, %16 : vector<32x32xf32>
    %28 = vector.broadcast %cst_22 : f32 to vector<32x32xf32>
    %29 = arith.minimumf %28, %27 : vector<32x32xf32>
    %cst_23 = arith.constant 0.00392156886 : f32
    %30 = vector.broadcast %cst_23 : f32 to vector<32x32xf32>
    %31 = arith.mulf %29, %30 : vector<32x32xf32>
    %c0_24 = arith.constant 0 : index
    %c0_25 = arith.constant 0 : index
    %c0_26 = arith.constant 0 : index
    %c0_27 = arith.constant 0 : index
    %32 = vector.load %arg6[%c0_24, %c0_25, %c0_26, %c0_27] : memref<1x3x32x32xf32, #tpu.memory_space<vmem>>, vector<1x1x32x32xf32>
    %33 = vector.shape_cast %32 : vector<1x1x32x32xf32> to vector<32x32xf32>
    %34 = vector.shape_cast %31 : vector<32x32xf32> to vector<1x1x32x32xf32>
    tpu.vector_store %arg6[%c0_24, %c0_25, %c0_26, %c0_27], %34 {strides = array<i32>} : memref<1x3x32x32xf32, #tpu.memory_space<vmem>>, vector<1x1x32x32xf32>,
    %cst_28 = arith.constant 0.000000e+00 : f32
    %cst_29 = arith.constant 2.550000e+02 : f32
    %35 = vector.broadcast %cst_28 : f32 to vector<32x32xf32>
    %36 = arith.maximumf %35, %22 : vector<32x32xf32>
    %37 = vector.broadcast %cst_29 : f32 to vector<32x32xf32>
    %38 = arith.minimumf %37, %36 : vector<32x32xf32>
    %cst_30 = arith.constant 0.00392156886 : f32
    %39 = vector.broadcast %cst_30 : f32 to vector<32x32xf32>
    %40 = arith.mulf %38, %39 : vector<32x32xf32>
    %c0_31 = arith.constant 0 : index
    %c1_32 = arith.constant 1 : index
    %c0_33 = arith.constant 0 : index
    %c0_34 = arith.constant 0 : index
    %41 = vector.load %arg6[%c0_31, %c1_32, %c0_33, %c0_34] : memref<1x3x32x32xf32, #tpu.memory_space<vmem>>, vector<1x1x32x32xf32>
    %42 = vector.shape_cast %41 : vector<1x1x32x32xf32> to vector<32x32xf32>
    %43 = vector.shape_cast %40 : vector<32x32xf32> to vector<1x1x32x32xf32>
    tpu.vector_store %arg6[%c0_31, %c1_32, %c0_33, %c0_34], %43 {strides = array<i32>} : memref<1x3x32x32xf32, #tpu.memory_space<vmem>>, vector<1x1x32x32xf32>,
    %cst_35 = arith.constant 0.000000e+00 : f32
    %cst_36 = arith.constant 2.550000e+02 : f32
    %44 = vector.broadcast %cst_35 : f32 to vector<32x32xf32>
    %45 = arith.maximumf %44, %25 : vector<32x32xf32>
    %46 = vector.broadcast %cst_36 : f32 to vector<32x32xf32>
    %47 = arith.minimumf %46, %45 : vector<32x32xf32>
    %cst_37 = arith.constant 0.00392156886 : f32
    %48 = vector.broadcast %cst_37 : f32 to vector<32x32xf32>
    %49 = arith.mulf %47, %48 : vector<32x32xf32>
    %c0_38 = arith.constant 0 : index
    %c2 = arith.constant 2 : index
    %c0_39 = arith.constant 0 : index
    %c0_40 = arith.constant 0 : index
    %50 = vector.load %arg6[%c0_38, %c2, %c0_39, %c0_40] : memref<1x3x32x32xf32, #tpu.memory_space<vmem>>, vector<1x1x32x32xf32>
    %51 = vector.shape_cast %50 : vector<1x1x32x32xf32> to vector<32x32xf32>
    %52 = vector.shape_cast %49 : vector<32x32xf32> to vector<1x1x32x32xf32>
    tpu.vector_store %arg6[%c0_38, %c2, %c0_39, %c0_40], %52 {strides = array<i32>} : memref<1x3x32x32xf32, #tpu.memory_space<vmem>>, vector<1x1x32x32xf32>,
    return
  }
  func.func @transform_0(%arg0: i32, %arg1: i32) -> (i32, i32, i32) {
    %c0_i32 = arith.constant 0 : i32
    %c0_i32_0 = arith.constant 0 : i32
    return %arg0, %arg1, %c0_i32 : i32, i32, i32
  }
  func.func @transform_1(%arg0: i32, %arg1: i32) -> (i32, i32, i32, i32) {
    %c0_i32 = arith.constant 0 : i32
    %c0_i32_0 = arith.constant 0 : i32
    %c0_i32_1 = arith.constant 0 : i32
    return %arg0, %c0_i32, %arg1, %c0_i32_0 : i32, i32, i32, i32
  }
  func.func @transform_2(%arg0: i32, %arg1: i32) -> (i32, i32) {
    %c0_i32 = arith.constant 0 : i32
    %c0_i32_0 = arith.constant 0 : i32
    %c0_i32_1 = arith.constant 0 : i32
    return %c0_i32, %c0_i32_0 : i32, i32
  }
  func.func @transform_3(%arg0: i32, %arg1: i32) -> (i32, i32) {
    %c0_i32 = arith.constant 0 : i32
    %c0_i32_0 = arith.constant 0 : i32
    %c0_i32_1 = arith.constant 0 : i32
    return %c0_i32, %c0_i32_0 : i32, i32
  }
  func.func @transform_4(%arg0: i32, %arg1: i32) -> (i32, i32, i32, i32) {
    %c0_i32 = arith.constant 0 : i32
    %c0_i32_0 = arith.constant 0 : i32
    %c0_i32_1 = arith.constant 0 : i32
    return %arg0, %c0_i32, %arg1, %c0_i32_0 : i32, i32, i32, i32
  }
}

</mosaic_0001>

<llo_original>
// kernel: _ptjpeg_jit.6
$region0: #{_ptjpeg_jit.6}
  #allocation0 [shape = 'u32[]', space=smem, size = 0x4, offset = 0x4, fixed_abs, tag = 'smem constant byte address 0x4 - core index']
  #allocation1 [shape = 'u32[72,128]{1,0:T(1,128)}', space=vmem, size = 0x9000, scoped, tag = 'internal scratch']
  %s0 = inlined_call_operand.vmem [shape: f32[8,128], index: 0, kind: input, shape index: {}]
  %s1 = inlined_call_operand.vmem [shape: f32[128,128], index: 1, kind: input, shape index: {}]
  %s2 = inlined_call_operand.vmem [shape: f32[128,128], index: 2, kind: input, shape index: {}]
  %s3 = inlined_call_operand.vmem [shape: f32[8,128], index: 3, kind: output, shape index: {}]
  %s4 = sld [smem:[#allocation0]]
  $region22: #{_ptjpeg_jit.6} parent=0
    _
  %s6 = ssub.s32 1, %s4
  %s7 = scalar_select 0, %s6, %s4
  // Predicated region
  $region2: #{_ptjpeg_jit.6} parent=0 // pred_check
    _
  $region3: #{_ptjpeg_jit.6} parent=0 // pred_check_branch
    %9 = sbr.rel (0) target = $region5
  $region4: #{_ptjpeg_jit.6} parent=0 // pred_region
    _
  $region5: #{_ptjpeg_jit.6} parent=0 // pred_fallthru
    _
  // Predicated region
  $region6: #{_ptjpeg_jit.6} parent=0 // pred_check
    _
  $region7: #{_ptjpeg_jit.6} parent=0 // pred_check_branch
    %11 = sbr.rel (0) target = $region9
  $region8: #{_ptjpeg_jit.6} parent=0 // pred_region
    _
  $region9: #{_ptjpeg_jit.6} parent=0 // pred_fallthru
    _
  // Predicated region
  $region10: #{_ptjpeg_jit.6} parent=0 // pred_check
    _
  $region11: #{_ptjpeg_jit.6} parent=0 // pred_check_branch
    %13 = sbr.rel (0) target = $region13
  $region12: #{_ptjpeg_jit.6} parent=0 // pred_region
    _
  $region13: #{_ptjpeg_jit.6} parent=0 // pred_fallthru
    _
  %v14 = vld [vmem:[%s0] sm:$0xff]
  %v15 = vld [vmem:[%s1] sm:$0xff]
  %v16 = vld [vmem:[%s1 + $0x8] sm:$0xff]
  %v17 = vld [vmem:[%s1 + $0x10] sm:$0xff]
  %v18 = vld [vmem:[%s1 + $0x18] sm:$0xff]
  %v19 = vld [vmem:[%s1 + $0x20] sm:$0xff]
  %v20 = vld [vmem:[%s1 + $0x28] sm:$0xff]
  %v21 = vld [vmem:[%s1 + $0x30] sm:$0xff]
  %v22 = vld [vmem:[%s1 + $0x38] sm:$0xff]
  %v23 = vld [vmem:[%s1 + $0x40] sm:$0xff]
  %v24 = vld [vmem:[%s1 + $0x48] sm:$0xff]
  %v25 = vld [vmem:[%s1 + $0x50] sm:$0xff]
  %v26 = vld [vmem:[%s1 + $0x58] sm:$0xff]
  %v27 = vld [vmem:[%s1 + $0x60] sm:$0xff]
  %v28 = vld [vmem:[%s1 + $0x68] sm:$0xff]
  %v29 = vld [vmem:[%s1 + $0x70] sm:$0xff]
  %v30 = vld [vmem:[%s1 + $0x78] sm:$0xff]
  %31 = vmatpush.msra.mxu0 %v30
  %32 = vmatpush.msra.mxu0 %v29
  %33 = vmatpush.msra.mxu0 %v28
  %34 = vmatpush.msra.mxu0 %v27
  %35 = vmatpush.msra.mxu0 %v26
  %36 = vmatpush.msra.mxu0 %v25
  %37 = vmatpush.msra.mxu0 %v24
  %38 = vmatpush.msra.mxu0 %v23
  %39 = vmatpush.msra.mxu0 %v22
  %40 = vmatpush.msra.mxu0 %v21
  %41 = vmatpush.msra.mxu0 %v20
  %42 = vmatpush.msra.mxu0 %v19
  %43 = vmatpush.msra.mxu0 %v18
  %44 = vmatpush.msra.mxu0 %v17
  %45 = vmatpush.msra.mxu0 %v16
  %46 = vmatpush.msra.mxu0 %v15
  %47 = vmatmul.f32.gmra.mxu0 %v14
  %v48 = vpop.f32.mrf.mxu0
  %v49 = vadd.f32 0.0, %v48
  %50 = vdwg.mxu0
  %v51 = vround.ne.pseudo %v49
  %v52 = vld [vmem:[%s2] sm:$0xff]
  %v53 = vld [vmem:[%s2 + $0x8] sm:$0xff]
  %v54 = vld [vmem:[%s2 + $0x10] sm:$0xff]
  %v55 = vld [vmem:[%s2 + $0x18] sm:$0xff]
  %v56 = vld [vmem:[%s2 + $0x20] sm:$0xff]
  %v57 = vld [vmem:[%s2 + $0x28] sm:$0xff]
  %v58 = vld [vmem:[%s2 + $0x30] sm:$0xff]
  %v59 = vld [vmem:[%s2 + $0x38] sm:$0xff]
  %v60 = vld [vmem:[%s2 + $0x40] sm:$0xff]
  %v61 = vld [vmem:[%s2 + $0x48] sm:$0xff]
  %v62 = vld [vmem:[%s2 + $0x50] sm:$0xff]
  %v63 = vld [vmem:[%s2 + $0x58] sm:$0xff]
  %v64 = vld [vmem:[%s2 + $0x60] sm:$0xff]
  %v65 = vld [vmem:[%s2 + $0x68] sm:$0xff]
  %v66 = vld [vmem:[%s2 + $0x70] sm:$0xff]
  %v67 = vld [vmem:[%s2 + $0x78] sm:$0xff]
  %68 = vmatpush.msra.mxu0 %v67
  %69 = vmatpush.msra.mxu0 %v66
  %70 = vmatpush.msra.mxu0 %v65
  %71 = vmatpush.msra.mxu0 %v64
  %72 = vmatpush.msra.mxu0 %v63
  %73 = vmatpush.msra.mxu0 %v62
  %74 = vmatpush.msra.mxu0 %v61
  %75 = vmatpush.msra.mxu0 %v60
  %76 = vmatpush.msra.mxu0 %v59
  %77 = vmatpush.msra.mxu0 %v58
  %78 = vmatpush.msra.mxu0 %v57
  %79 = vmatpush.msra.mxu0 %v56
  %80 = vmatpush.msra.mxu0 %v55
  %81 = vmatpush.msra.mxu0 %v54
  %82 = vmatpush.msra.mxu0 %v53
  %83 = vmatpush.msra.mxu0 %v52
  %84 = vmatmul.f32.gmra.mxu0 %v51
  %v85 = vpop.f32.mrf.mxu0
  %v86 = vadd.f32 0.0, %v85
  %87 = vdwg.mxu0
  %88 = vst [vmem:[%s3] sm:$0xff] %v86
  // Predicated region
  $region14: #{_ptjpeg_jit.6} parent=0 // pred_check
    _
  $region15: #{_ptjpeg_jit.6} parent=0 // pred_check_branch
    %90 = sbr.rel (0) target = $region17
  $region16: #{_ptjpeg_jit.6} parent=0 // pred_region
    _
  $region17: #{_ptjpeg_jit.6} parent=0 // pred_fallthru
    _
  // Predicated region
  $region18: #{_ptjpeg_jit.6} parent=0 // pred_check
    _
  $region19: #{_ptjpeg_jit.6} parent=0 // pred_check_branch
    %92 = sbr.rel (0) target = $region21
  $region20: #{_ptjpeg_jit.6} parent=0 // pred_region
    _
  $region21: #{_ptjpeg_jit.6} parent=0 // pred_fallthru
    _

// kernel: _ptjpeg_jit.4
$region0: #{_ptjpeg_jit.4}
  #allocation0 [shape = 'u32[]', space=smem, size = 0x4, offset = 0x4, fixed_abs, tag = 'smem constant byte address 0x4 - core index']
  #allocation1 [shape = 'u32[72,128]{1,0:T(1,128)}', space=vmem, size = 0x9000, scoped, tag = 'internal scratch']
  %s0 = inlined_call_operand.hbm [shape: f32[2,3,32,32], index: 0, kind: input, shape index: {}]
  %s1 = inlined_call_operand.hbm [shape: f32[16,32], index: 1, kind: input, shape index: {}]
  %s2 = inlined_call_operand.hbm [shape: f32[32,16], index: 2, kind: input, shape index: {}]
  %s3 = inlined_call_operand.vmem [shape: f32[2,32,32], index: 3, kind: output, shape index: {0}]
  %s4 = inlined_call_operand.vmem [shape: f32[2,2,16,16], index: 4, kind: output, shape index: {1}]
  %5 = xla_tuple %s3, %s4
  %s6 = sld [smem:[#allocation0]]
  $region65: #{_ptjpeg_jit.4} parent=0
    _
  %s8 = ssub.s32 1, %s6
  %s9 = scalar_select 0, %s8, %s6
  $region1: #{_ptjpeg_jit.4} parent=0
    #allocation2 [shape = 'u8[98304]{0}', space=vmem, size = 0x18000, scoped, tag = 'input window, operand 0']
    #allocation3 [shape = 's32[2]{0}', space=sflag, size = 0x8, scoped, tag = 'scoped memory for _ptjpeg_jit.4']
    #allocation4 [shape = 'u8[8192]{0}', space=vmem, size = 0x2000, scoped, tag = 'input window, operand 1, single buffered']
    #allocation5 [shape = 's32[1]{0}', space=sflag, size = 0x4, scoped, tag = 'scoped memory for _ptjpeg_jit.4']
    #allocation6 [shape = 'u8[16384]{0}', space=vmem, size = 0x4000, scoped, tag = 'input window, operand 2, single buffered']
    %10 = vsyncpa [#allocation3], 0
    %s11 = scalar_lea.sflag [#allocation3], 1
    %12 = vsyncpa %s11, 0
    %13 = vsyncpa [#allocation5], 0
    loop: start=0, step=1, limit=4
    $region2: #{_ptjpeg_jit.4} parent=1 // loop_pre_header
      _
    $region3: #{_ptjpeg_jit.4} parent=1 // loop_header
      %s15 = sphi 0, %s19
      %p16 = scmp.ge.s32.totalorder %s15, 4
      %s22 = sphi 0, %s34
      %s23 = sphi 0, %s30
      %s24 = sphi 0, %s22
      %s25 = sphi 0, %s23
      %s26 = sphi 0, %s24
      %s27 = sphi 0, %s25
      %s39 = sphi 0, %s41
      %s42 = sphi 0, %s39
      %s43 = sphi 0, %s42
      %s59 = sphi 0, %s43
      %s63 = sphi 0, %s63
      %s65 = sphi 0, %s63
      %s66 = sphi 0, %s65
      %s80 = sphi 0, %s66
      %s84 = sphi 0, %s84
      %s86 = sphi 0, %s84
      %s87 = sphi 0, %s86
      %s101 = sphi 0, %s87
      %s109 = sphi 0, %s111
      %s112 = sphi 0, %s109
      %s113 = sphi 0, %s112
      %s129 = sphi 0, %s113
      %s137 = sphi 0, %s139
      %s140 = sphi 0, %s137
      %s141 = sphi 0, %s140
      %s157 = sphi 0, %s141
    $region4: #{_ptjpeg_jit.4} parent=1 // loop_header_branch
      %18 = sbr.rel (%p16) target = $region8
    $region5: #{_ptjpeg_jit.4} parent=1 // loop_body
      %s20 = ssub.s32 %s15, 1
      %s21 = ssub.s32 %s15, 2
      %s28 = sadd.s32 1, %s23
      %p29 = scmp.ge.s32.totalorder %s28, 1
      %s30 = scalar_select %p29, 0, %s28
      %s31 = sadd.s32 1, %s22
      %s32 = scalar_select %p29, %s31, %s22
      %p33 = scmp.ge.s32.totalorder %s32, 2
      %s34 = scalar_select %p33, 0, %s32
      %s35 = ssub.s32 %s22, %s34
      %s36 = ssub.s32 %s23, %s30
      %s37 = sor.u32 %s35, %s36
      %p38 = scmp.eq.s32.totalorder %s37, 0
      %s40 = sadd.s32 %s39, 1
      %s41 = scalar_select %p38, %s39, %s40
      %p44 = pneg %p38
      %p45 = scmp.eq.s32.totalorder %s15, 1
      %p46 = por %p44, %p45
      %p47 = scmp.ne.s32.totalorder %s39, %s42
      %p48 = scmp.eq.s32.totalorder %s15, 0
      %p49 = por %p47, %p48
      %p50 = scmp.ne.s32.totalorder %s39, %s42
      %p51 = scmp.eq.s32.totalorder %s20, 1
      %p52 = por %p50, %p51
      %p53 = scmp.ne.s32.totalorder %s42, %s43
      %p54 = scmp.eq.s32.totalorder %s20, 0
      %p55 = por %p53, %p54
      %p56 = scmp.ne.s32.totalorder %s42, %s43
      %p57 = scmp.eq.s32.totalorder %s21, 1
      %p58 = por %p56, %p57
      %p60 = scmp.ne.s32.totalorder %s43, %s59
      %p61 = scmp.eq.s32.totalorder %s21, 0
      %p62 = por %p60, %p61
      %s64 = sadd.s32 %s63, 1
      %p67 = scmp.eq.s32.totalorder %s15, 1
      %p68 = scmp.ne.s32.totalorder %s63, %s65
      %p69 = scmp.eq.s32.totalorder %s15, 0
      %p70 = por %p68, %p69
      %p71 = scmp.ne.s32.totalorder %s63, %s65
      %p72 = scmp.eq.s32.totalorder %s20, 1
      %p73 = por %p71, %p72
      %p74 = scmp.ne.s32.totalorder %s65, %s66
      %p75 = scmp.eq.s32.totalorder %s20, 0
      %p76 = por %p74, %p75
      %p77 = scmp.ne.s32.totalorder %s65, %s66
      %p78 = scmp.eq.s32.totalorder %s21, 1
      %p79 = por %p77, %p78
      %p81 = scmp.ne.s32.totalorder %s66, %s80
      %p82 = scmp.eq.s32.totalorder %s21, 0
      %p83 = por %p81, %p82
      %s85 = sadd.s32 %s84, 1
      %p88 = scmp.eq.s32.totalorder %s15, 1
      %p89 = scmp.ne.s32.totalorder %s84, %s86
      %p90 = scmp.eq.s32.totalorder %s15, 0
      %p91 = por %p89, %p90
      %p92 = scmp.ne.s32.totalorder %s84, %s86
      %p93 = scmp.eq.s32.totalorder %s20, 1
      %p94 = por %p92, %p93
      %p95 = scmp.ne.s32.totalorder %s86, %s87
      %p96 = scmp.eq.s32.totalorder %s20, 0
      %p97 = por %p95, %p96
      %p98 = scmp.ne.s32.totalorder %s86, %s87
      %p99 = scmp.eq.s32.totalorder %s21, 1
      %p100 = por %p98, %p99
      %p102 = scmp.ne.s32.totalorder %s87, %s101
      %p103 = scmp.eq.s32.totalorder %s21, 0
      %p104 = por %p102, %p103
      %s105 = ssub.s32 %s22, %s34
      %s106 = ssub.s32 %s23, %s30
      %s107 = sor.u32 %s105, %s106
      %p108 = scmp.eq.s32.totalorder %s107, 0
      %s110 = sadd.s32 %s109, 1
      %s111 = scalar_select %p108, %s109, %s110
      %p114 = pneg %p108
      %p115 = scmp.eq.s32.totalorder %s15, 1
      %p116 = por %p114, %p115
      %p117 = scmp.ne.s32.totalorder %s109, %s112
      %p118 = scmp.eq.s32.totalorder %s15, 0
      %p119 = por %p117, %p118
      %p120 = scmp.ne.s32.totalorder %s109, %s112
      %p121 = scmp.eq.s32.totalorder %s20, 1
      %p122 = por %p120, %p121
      %p123 = scmp.ne.s32.totalorder %s112, %s113
      %p124 = scmp.eq.s32.totalorder %s20, 0
      %p125 = por %p123, %p124
      %p126 = scmp.ne.s32.totalorder %s112, %s113
      %p127 = scmp.eq.s32.totalorder %s21, 1
      %p128 = por %p126, %p127
      %p130 = scmp.ne.s32.totalorder %s113, %s129
      %p131 = scmp.eq.s32.totalorder %s21, 0
      %p132 = por %p130, %p131
      %s133 = ssub.s32 %s22, %s34
      %s134 = ssub.s32 %s23, %s30
      %s135 = sor.u32 %s133, %s134
      %p136 = scmp.eq.s32.totalorder %s135, 0
      %s138 = sadd.s32 %s137, 1
      %s139 = scalar_select %p136, %s137, %s138
      %p142 = pneg %p136
      %p143 = scmp.eq.s32.totalorder %s15, 1
      %p144 = por %p142, %p143
      %p145 = scmp.ne.s32.totalorder %s137, %s140
      %p146 = scmp.eq.s32.totalorder %s15, 0
      %p147 = por %p145, %p146
      %p148 = scmp.ne.s32.totalorder %s137, %s140
      %p149 = scmp.eq.s32.totalorder %s20, 1
      %p150 = por %p148, %p149
      %p151 = scmp.ne.s32.totalorder %s140, %s141
      %p152 = scmp.eq.s32.totalorder %s20, 0
      %p153 = por %p151, %p152
      %p154 = scmp.ne.s32.totalorder %s140, %s141
      %p155 = scmp.eq.s32.totalorder %s21, 1
      %p156 = por %p154, %p155
      %p158 = scmp.ne.s32.totalorder %s141, %s157
      %p159 = scmp.eq.s32.totalorder %s21, 0
      %p160 = por %p158, %p159
      %p161 = scmp.le.s32.totalorder 1, %s15
      %p162 = scmp.lt.s32.totalorder %s15, 3
      %p163 = pnand %p161, %p162
      %p164 = pneg %p163
      // Predicated region
      $region9: #{_ptjpeg_jit.4} parent=5 // pred_check
        _
      $region10: #{_ptjpeg_jit.4} parent=5 // pred_check_branch
        %166 = sbr.rel (%p163) target = $region12
      $region11: #{_ptjpeg_jit.4} parent=5 // pred_region
        %s167 = ssub.s32 %s15, 1
        // Predicated region
        $region13: #{_ptjpeg_jit.4} parent=11 // pred_check
          %p168 = pneg %p76
        $region14: #{_ptjpeg_jit.4} parent=11 // pred_check_branch
          %170 = sbr.rel (%p168) target = $region16
        $region15: #{_ptjpeg_jit.4} parent=11 // pred_region
          %172 = vsyncadd [#allocation5], 0
          %s173 = sshll.u32 %s1, 4
          %s174 = int_to_ptr.hbm [resolvable:$true] %s173
          %s175 = sshll.u32 [#allocation4], 4
          %s176 = int_to_ptr.vmem [resolvable:$true] %s175
          %181 = dma.hbm_to_vmem [thread:$0]  %s174, 256, %s176, [#allocation5], 128, 128, 8
        $region16: #{_ptjpeg_jit.4} parent=11 // pred_fallthru
          _
        // Predicated region
        $region17: #{_ptjpeg_jit.4} parent=11 // pred_check
          %p182 = pneg %p97
        $region18: #{_ptjpeg_jit.4} parent=11 // pred_check_branch
          %184 = sbr.rel (%p182) target = $region20
        $region19: #{_ptjpeg_jit.4} parent=11 // pred_region
          %186 = vsyncadd [#allocation5], 0
          %s187 = sshll.u32 %s2, 4
          %s188 = int_to_ptr.hbm [resolvable:$true] %s187
          %s189 = sshll.u32 [#allocation6], 4
          %s190 = int_to_ptr.vmem [resolvable:$true] %s189
          %195 = dma.hbm_to_vmem [thread:$0]  %s188, 512, %s190, [#allocation5], 128, 128, 8
        $region20: #{_ptjpeg_jit.4} parent=11 // pred_fallthru
          _
      $region12: #{_ptjpeg_jit.4} parent=5 // pred_fallthru
        _
      %p196 = scmp.lt.s32.totalorder %s15, 2
      // Predicated region
      $region21: #{_ptjpeg_jit.4} parent=5 // pred_check
        %p197 = pneg %p196
      $region22: #{_ptjpeg_jit.4} parent=5 // pred_check_branch
        %199 = sbr.rel (%p197) target = $region24
      $region23: #{_ptjpeg_jit.4} parent=5 // pred_region
        // Predicated region
        $region25: #{_ptjpeg_jit.4} parent=23 // pred_check
          %p200 = pneg %p49
        $region26: #{_ptjpeg_jit.4} parent=23 // pred_check_branch
          %202 = sbr.rel (%p200) target = $region28
        $region27: #{_ptjpeg_jit.4} parent=23 // pred_region
          %s203 = sand.u32 %s39, 1
          %s204 = scalar_lea.sflag [#allocation3], %s203
          %s205 = sand.u32 %s39, 1
          %s206 = smul.addr %s205, 96
          %s207 = scalar_lea.vmem [#allocation2], %s206
          %s208 = smul.u32 4, %s23
          %210 = vsyncadd %s204, 0
          %s211 = smul.addr %s22, 12
          %s212 = sadd.s32 %s208, %s211
          %s213 = smul.addr %s212, 8
          %s214 = scalar_lea.hbm %s0, %s213
          %s215 = sshll.u32 %s214, 4
          %s216 = int_to_ptr.hbm [resolvable:$true] %s215
          %s217 = sshll.u32 %s207, 4
          %s218 = int_to_ptr.vmem [resolvable:$true] %s217
          %223 = dma.hbm_to_vmem [thread:$0]  %s216, 1536, %s218, %s204, 128, 128, 8
        $region28: #{_ptjpeg_jit.4} parent=23 // pred_fallthru
          _
      $region24: #{_ptjpeg_jit.4} parent=5 // pred_fallthru
        _
      %p224 = scmp.le.s32.totalorder 1, %s15
      %p225 = scmp.lt.s32.totalorder %s15, 3
      %p226 = pnand %p224, %p225
      %p227 = pneg %p226
      // Predicated region
      $region29: #{_ptjpeg_jit.4} parent=5 // pred_check
        _
      $region30: #{_ptjpeg_jit.4} parent=5 // pred_check_branch
        %229 = sbr.rel (%p226) target = $region32
      $region31: #{_ptjpeg_jit.4} parent=5 // pred_region
        %s230 = ssub.s32 %s15, 1
        %s231 = sand.u32 %s42, 1
        %s232 = scalar_lea.sflag [#allocation3], %s231
        %s233 = sand.u32 %s42, 1
        %s234 = smul.addr %s233, 96
        %s235 = scalar_lea.vmem [#allocation2], %s234
        // Predicated region
        $region33: #{_ptjpeg_jit.4} parent=31 // pred_check
          %p236 = pneg %p55
        $region34: #{_ptjpeg_jit.4} parent=31 // pred_check_branch
          %238 = sbr.rel (%p236) target = $region36
        $region35: #{_ptjpeg_jit.4} parent=31 // pred_region
          %240 = dma.done %s232, 1536
        $region36: #{_ptjpeg_jit.4} parent=31 // pred_fallthru
          _
        // Predicated region
        $region37: #{_ptjpeg_jit.4} parent=31 // pred_check
          %p241 = pneg %p76
        $region38: #{_ptjpeg_jit.4} parent=31 // pred_check_branch
          %243 = sbr.rel (%p241) target = $region40
        $region39: #{_ptjpeg_jit.4} parent=31 // pred_region
          %245 = dma.done [#allocation5], 256
        $region40: #{_ptjpeg_jit.4} parent=31 // pred_fallthru
          _
        // Predicated region
        $region41: #{_ptjpeg_jit.4} parent=31 // pred_check
          %p246 = pneg %p97
        $region42: #{_ptjpeg_jit.4} parent=31 // pred_check_branch
          %248 = sbr.rel (%p246) target = $region44
        $region43: #{_ptjpeg_jit.4} parent=31 // pred_region
          %250 = dma.done [#allocation5], 512
        $region44: #{_ptjpeg_jit.4} parent=31 // pred_fallthru
          _
        %s251 = sand.u32 %s42, 1
        %s252 = scalar_lea.sflag [#allocation3], %s251
        %s253 = sand.u32 %s42, 1
        %s254 = smul.addr %s253, 96
        %s255 = scalar_lea.vmem [#allocation2], %s254
        %p256 = pneg %p55
        %p257 = pneg %p52
        %p258 = pneg %p76
        %p259 = pneg %p73
        %p260 = pneg %p97
        %p261 = pneg %p94
        %p262 = pneg %p125
        %p263 = pneg %p122
        %s264 = smul.u32 4, %s25
        %p265 = scmp.lt.s32.totalorder %s24, 1
        %s266 = scalar_select %p265, %s24, 1
        %p267 = scmp.lt.s32.totalorder %s264, 3
        %s268 = scalar_select %p267, %s264, 3
        %s269 = smul.addr %s266, 4
        %s270 = sadd.s32 %s268, %s269
        %s271 = smul.addr %s270, 8
        %s272 = scalar_lea.vmem %s3, %s271
        %p273 = pneg %p153
        %p274 = pneg %p150
        %s275 = smul.u32 2, %s25
        %p276 = scmp.lt.s32.totalorder %s24, 1
        %s277 = scalar_select %p276, %s24, 1
        %p278 = scmp.lt.s32.totalorder %s275, 1
        %s279 = scalar_select %p278, %s275, 1
        %s280 = smul.addr %s277, 4
        %s281 = sadd.s32 %s279, %s280
        %s282 = smul.addr %s281, 8
        %s283 = scalar_lea.vmem %s4, %s282
        %s284 = smul.u32 4, %s25
        %s285 = smul.u32 4, %s25
        %p286 = scmp.lt.s32.totalorder %s24, 1
        %s287 = scalar_select %p286, %s24, 1
        %p288 = scmp.lt.s32.totalorder %s285, 3
        %s289 = scalar_select %p288, %s285, 3
        %s290 = smul.addr %s287, 4
        %s291 = sadd.s32 %s289, %s290
        %s292 = smul.addr %s291, 8
        %s293 = scalar_lea.vmem %s3, %s292
        %s294 = smul.u32 4, %s25
        %s295 = smul.u32 2, %s25
        %p296 = scmp.lt.s32.totalorder %s24, 1
        %s297 = scalar_select %p296, %s24, 1
        %p298 = scmp.lt.s32.totalorder %s295, 1
        %s299 = scalar_select %p298, %s295, 1
        %s300 = smul.addr %s297, 4
        %s301 = sadd.s32 %s299, %s300
        %s302 = smul.addr %s301, 8
        %s303 = scalar_lea.vmem %s4, %s302
        %s304 = smul.u32 2, %s25
        %v305 = vld [vmem:[%s235] sm:$0xff]
        %v306 = vld [vmem:[%s235 + $0x8] sm:$0xff]
        %v307 = vld [vmem:[%s235 + $0x10] sm:$0xff]
        %v308 = vld [vmem:[%s235 + $0x18] sm:$0xff]
        %v309 = vmul.f32 %v305, 255.0
        %v310 = vmul.f32 %v306, 255.0
        %v311 = vmul.f32 %v307, 255.0
        %v312 = vmul.f32 %v308, 255.0
        %s313 = scalar_lea.vmem %s235, 32 [#allocation2]
        %v314 = vld [vmem:[%s313] sm:$0xff]
        %v315 = vld [vmem:[%s313 + $0x8] sm:$0xff]
        %v316 = vld [vmem:[%s313 + $0x10] sm:$0xff]
        %v317 = vld [vmem:[%s313 + $0x18] sm:$0xff]
        %v318 = vmul.f32 %v314, 255.0
        %v319 = vmul.f32 %v315, 255.0
        %v320 = vmul.f32 %v316, 255.0
        %v321 = vmul.f32 %v317, 255.0
        %s322 = scalar_lea.vmem %s235, 64 [#allocation2]
        %v323 = vld [vmem:[%s322] sm:$0xff]
        %v324 = vld [vmem:[%s322 + $0x8] sm:$0xff]
        %v325 = vld [vmem:[%s322 + $0x10] sm:$0xff]
        %v326 = vld [vmem:[%s322 + $0x18] sm:$0xff]
        %v327 = vmul.f32 %v323, 255.0
        %v328 = vmul.f32 %v324, 255.0
        %v329 = vmul.f32 %v325, 255.0
        %v330 = vmul.f32 %v326, 255.0
        %v331 = vmul.f32 %v309, 0.299
        %v332 = vmul.f32 %v310, 0.299
        %v333 = vmul.f32 %v311, 0.299
        %v334 = vmul.f32 %v312, 0.299
        %v335 = vmul.f32 %v318, 0.587
        %v336 = vmul.f32 %v319, 0.587
        %v337 = vmul.f32 %v320, 0.587
        %v338 = vmul.f32 %v321, 0.587
        %v339 = vadd.f32 %v331, %v335
        %v340 = vadd.f32 %v332, %v336
        %v341 = vadd.f32 %v333, %v337
        %v342 = vadd.f32 %v334, %v338
        %v343 = vmul.f32 %v327, 0.114
        %v344 = vmul.f32 %v328, 0.114
        %v345 = vmul.f32 %v329, 0.114
        %v346 = vmul.f32 %v330, 0.114
        %v347 = vadd.f32 %v339, %v343
        %v348 = vadd.f32 %v340, %v344
        %v349 = vadd.f32 %v341, %v345
        %v350 = vadd.f32 %v342, %v346
        %v351 = vsub.f32 %v347, 128.0
        %v352 = vsub.f32 %v348, 128.0
        %v353 = vsub.f32 %v349, 128.0
        %v354 = vsub.f32 %v350, 128.0
        %v355 = vmul.f32 %v309, -0.168736
        %v356 = vmul.f32 %v310, -0.168736
        %v357 = vmul.f32 %v311, -0.168736
        %v358 = vmul.f32 %v312, -0.168736
        %v359 = vmul.f32 %v318, 0.331264
        %v360 = vmul.f32 %v319, 0.331264
        %v361 = vmul.f32 %v320, 0.331264
        %v362 = vmul.f32 %v321, 0.331264
        %v363 = vsub.f32 %v355, %v359
        %v364 = vsub.f32 %v356, %v360
        %v365 = vsub.f32 %v357, %v361
        %v366 = vsub.f32 %v358, %v362
        %v367 = vmul.f32 %v327, 0.5
        %v368 = vmul.f32 %v328, 0.5
        %v369 = vmul.f32 %v329, 0.5
        %v370 = vmul.f32 %v330, 0.5
        %v371 = vadd.f32 %v363, %v367
        %v372 = vadd.f32 %v364, %v368
        %v373 = vadd.f32 %v365, %v369
        %v374 = vadd.f32 %v366, %v370
        %v375 = vmul.f32 %v309, 0.5
        %v376 = vmul.f32 %v310, 0.5
        %v377 = vmul.f32 %v311, 0.5
        %v378 = vmul.f32 %v312, 0.5
        %v379 = vmul.f32 %v318, 0.418688
        %v380 = vmul.f32 %v319, 0.418688
        %v381 = vmul.f32 %v320, 0.418688
        %v382 = vmul.f32 %v321, 0.418688
        %v383 = vsub.f32 %v375, %v379
        %v384 = vsub.f32 %v376, %v380
        %v385 = vsub.f32 %v377, %v381
        %v386 = vsub.f32 %v378, %v382
        %v387 = vmul.f32 %v327, 0.081312
        %v388 = vmul.f32 %v328, 0.081312
        %v389 = vmul.f32 %v329, 0.081312
        %v390 = vmul.f32 %v330, 0.081312
        %v391 = vsub.f32 %v383, %v387
        %v392 = vsub.f32 %v384, %v388
        %v393 = vsub.f32 %v385, %v389
        %v394 = vsub.f32 %v386, %v390
        %vm395 = vcmask 261120
        %396 = vst.msk [vmem:[%s293] sm:$0xff] %vm395, %v351
        %397 = vst.msk [vmem:[%s293 + $0x8] sm:$0xff] %vm395, %v352
        %398 = vst.msk [vmem:[%s293 + $0x10] sm:$0xff] %vm395, %v353
        %399 = vst.msk [vmem:[%s293 + $0x18] sm:$0xff] %vm395, %v354
        %v400 = vld [vmem:[#allocation4] sm:$0xff]
        %v401 = vld [vmem:[#allocation4 + $0x8] sm:$0xff]
        %v402 = vld [vmem:[#allocation6] sm:$0xff]
        %v403 = vld [vmem:[#allocation6 + $0x8] sm:$0xff]
        %v404 = vld [vmem:[#allocation6 + $0x10] sm:$0xff]
        %v405 = vld [vmem:[#allocation6 + $0x18] sm:$0xff]
        %v406 = vlaneseq
        %v407 = vand.u32 %v406, 127
        %vm408 = vcmp.lt.s32.totalorder %v407, 0
        %v409 = vsub.s32 0, %v407
        %v410 = vsel %vm408, %v409, %v407
        %v411 = vshrl.u32 %v410, 1
        %v412 = vand.u32 %v410, 1
        %v413 = vsub.s32 0, %v412
        %v414 = vsel %vm408, %v413, %v412
        %vm415 = vcmp.ne.s32.totalorder %v414, 0
        %vm416 = vcmp.lt.s32.totalorder %v414, 0
        %vm417 = vmand %vm416, %vm415
        %v418 = vadd.s32 %v414, 2
        %v419 = vsel %vm417, %v418, %v414
        %v420 = vadd.s32 %v419, 1
        %v421 = vcvt.s32.f32 %v420
        %v422 = vmul.f32 %v421, 0.25
        %v424 = vsel %vm395, %v400, 0
        %v427 = vsel %vm395, %v401, 0
        %429 = vmatpush.msra.mxu0 0.0
        %430 = vmatpush.msra.mxu0 0.0
        %431 = vmatpush.msra.mxu0 0.0
        %432 = vmatpush.msra.mxu0 0.0
        %433 = vmatpush.msra.mxu0 0.0
        %434 = vmatpush.msra.mxu0 0.0
        %435 = vmatpush.msra.mxu0 0.0
        %436 = vmatpush.msra.mxu0 0.0
        %437 = vmatpush.msra.mxu0 0.0
        %438 = vmatpush.msra.mxu0 0.0
        %439 = vmatpush.msra.mxu0 0.0
        %440 = vmatpush.msra.mxu0 0.0
        %441 = vmatpush.msra.mxu0 %v374
        %442 = vmatpush.msra.mxu0 %v373
        %443 = vmatpush.msra.mxu0 %v372
        %444 = vmatpush.msra.mxu0 %v371
        %445 = vmatmul.f32.gmra.mxu0 %v424
        %v446 = vpop.f32.mrf.mxu0
        %v447 = vadd.f32 0.0, %v446
        %448 = vmatmul.f32.gmra.mxu0 %v427
        %v449 = vpop.f32.mrf.mxu0
        %v450 = vadd.f32 0.0, %v449
        %451 = vdwg.mxu0
        %v453 = vsel %vm395, %v447, 0
        %v456 = vsel %vm395, %v450, 0
        %458 = vmatpush.msra.mxu0 0.0
        %459 = vmatpush.msra.mxu0 0.0
        %460 = vmatpush.msra.mxu0 0.0
        %461 = vmatpush.msra.mxu0 0.0
        %462 = vmatpush.msra.mxu0 0.0
        %463 = vmatpush.msra.mxu0 0.0
        %464 = vmatpush.msra.mxu0 0.0
        %465 = vmatpush.msra.mxu0 0.0
        %466 = vmatpush.msra.mxu0 0.0
        %467 = vmatpush.msra.mxu0 0.0
        %468 = vmatpush.msra.mxu0 0.0
        %469 = vmatpush.msra.mxu0 0.0
        %470 = vmatpush.msra.mxu0 %v405
        %471 = vmatpush.msra.mxu0 %v404
        %472 = vmatpush.msra.mxu0 %v403
        %473 = vmatpush.msra.mxu0 %v402
        %474 = vmatmul.f32.gmra.mxu0 %v453
        %v475 = vpop.f32.mrf.mxu0
        %v476 = vadd.f32 %v422, %v475
        %477 = vmatmul.f32.gmra.mxu0 %v456
        %v478 = vpop.f32.mrf.mxu0
        %v479 = vadd.f32 %v422, %v478
        %480 = vdwg.mxu0
        %v481 = vfloor.f32 %v476
        %v482 = vfloor.f32 %v479
        %vm483 = vcmask 130048
        %484 = vst.msk [vmem:[%s303] sm:$0xff] %vm483, %v481
        %485 = vst.msk [vmem:[%s303 + $0x8] sm:$0xff] %vm483, %v482
        %486 = vmatpush.msra.mxu0 0.0
        %487 = vmatpush.msra.mxu0 0.0
        %488 = vmatpush.msra.mxu0 0.0
        %489 = vmatpush.msra.mxu0 0.0
        %490 = vmatpush.msra.mxu0 0.0
        %491 = vmatpush.msra.mxu0 0.0
        %492 = vmatpush.msra.mxu0 0.0
        %493 = vmatpush.msra.mxu0 0.0
        %494 = vmatpush.msra.mxu0 0.0
        %495 = vmatpush.msra.mxu0 0.0
        %496 = vmatpush.msra.mxu0 0.0
        %497 = vmatpush.msra.mxu0 0.0
        %498 = vmatpush.msra.mxu0 %v394
        %499 = vmatpush.msra.mxu0 %v393
        %500 = vmatpush.msra.mxu0 %v392
        %501 = vmatpush.msra.mxu0 %v391
        %502 = vmatmul.f32.gmra.mxu0 %v424
        %v503 = vpop.f32.mrf.mxu0
        %v504 = vadd.f32 0.0, %v503
        %505 = vmatmul.f32.gmra.mxu0 %v427
        %v506 = vpop.f32.mrf.mxu0
        %v507 = vadd.f32 0.0, %v506
        %508 = vdwg.mxu0
        %v510 = vsel %vm395, %v504, 0
        %v513 = vsel %vm395, %v507, 0
        %515 = vmatpush.msra.mxu0 0.0
        %516 = vmatpush.msra.mxu0 0.0
        %517 = vmatpush.msra.mxu0 0.0
        %518 = vmatpush.msra.mxu0 0.0
        %519 = vmatpush.msra.mxu0 0.0
        %520 = vmatpush.msra.mxu0 0.0
        %521 = vmatpush.msra.mxu0 0.0
        %522 = vmatpush.msra.mxu0 0.0
        %523 = vmatpush.msra.mxu0 0.0
        %524 = vmatpush.msra.mxu0 0.0
        %525 = vmatpush.msra.mxu0 0.0
        %526 = vmatpush.msra.mxu0 0.0
        %527 = vmatpush.msra.mxu0 %v405
        %528 = vmatpush.msra.mxu0 %v404
        %529 = vmatpush.msra.mxu0 %v403
        %530 = vmatpush.msra.mxu0 %v402
        %531 = vmatmul.f32.gmra.mxu0 %v510
        %v532 = vpop.f32.mrf.mxu0
        %v533 = vadd.f32 %v422, %v532
        %534 = vmatmul.f32.gmra.mxu0 %v513
        %v535 = vpop.f32.mrf.mxu0
        %v536 = vadd.f32 %v422, %v535
        %537 = vdwg.mxu0
        %v538 = vfloor.f32 %v533
        %v539 = vfloor.f32 %v536
        %s540 = scalar_lea.vmem %s303, 16
        %541 = vst.msk [vmem:[%s540] sm:$0xff] %vm483, %v538
        %542 = vst.msk [vmem:[%s540 + $0x8] sm:$0xff] %vm483, %v539
        %s543 = smul.u32 4, %s25
        %p544 = scmp.lt.s32.totalorder %s24, 1
        %s545 = scalar_select %p544, %s24, 1
        %p546 = scmp.lt.s32.totalorder %s543, 3
        %s547 = scalar_select %p546, %s543, 3
        %s548 = smul.addr %s545, 4
        %s549 = sadd.s32 %s547, %s548
        %s550 = smul.addr %s549, 8
        %s551 = scalar_lea.vmem %s3, %s550
        %s552 = smul.u32 2, %s25
        %p553 = scmp.lt.s32.totalorder %s24, 1
        %s554 = scalar_select %p553, %s24, 1
        %p555 = scmp.lt.s32.totalorder %s552, 1
        %s556 = scalar_select %p555, %s552, 1
        %s557 = smul.addr %s554, 4
        %s558 = sadd.s32 %s556, %s557
        %s559 = smul.addr %s558, 8
        %s560 = scalar_lea.vmem %s4, %s559
        // Predicated region
        $region45: #{_ptjpeg_jit.4} parent=31 // pred_check
          %p561 = pneg %p122
        $region46: #{_ptjpeg_jit.4} parent=31 // pred_check_branch
          %563 = sbr.rel (%p561) target = $region48
        $region47: #{_ptjpeg_jit.4} parent=31 // pred_region
          %s564 = smul.u32 4, %s25
        $region48: #{_ptjpeg_jit.4} parent=31 // pred_fallthru
          _
        // Predicated region
        $region49: #{_ptjpeg_jit.4} parent=31 // pred_check
          %p565 = pneg %p150
        $region50: #{_ptjpeg_jit.4} parent=31 // pred_check_branch
          %567 = sbr.rel (%p565) target = $region52
        $region51: #{_ptjpeg_jit.4} parent=31 // pred_region
          %s568 = smul.u32 2, %s25
        $region52: #{_ptjpeg_jit.4} parent=31 // pred_fallthru
          _
      $region32: #{_ptjpeg_jit.4} parent=5 // pred_fallthru
        _
      %p569 = scmp.le.s32.totalorder 2, %s15
      // Predicated region
      $region53: #{_ptjpeg_jit.4} parent=5 // pred_check
        %p570 = pneg %p569
      $region54: #{_ptjpeg_jit.4} parent=5 // pred_check_branch
        %572 = sbr.rel (%p570) target = $region56
      $region55: #{_ptjpeg_jit.4} parent=5 // pred_region
        %s573 = ssub.s32 %s15, 2
        // Predicated region
        $region57: #{_ptjpeg_jit.4} parent=55 // pred_check
          %p574 = pneg %p128
        $region58: #{_ptjpeg_jit.4} parent=55 // pred_check_branch
          %576 = sbr.rel (%p574) target = $region60
        $region59: #{_ptjpeg_jit.4} parent=55 // pred_region
          %s577 = smul.u32 4, %s27
          %p578 = scmp.lt.s32.totalorder %s26, 1
          %s579 = scalar_select %p578, %s26, 1
          %p580 = scmp.lt.s32.totalorder %s577, 3
          %s581 = scalar_select %p580, %s577, 3
          %s582 = smul.addr %s579, 4
          %s583 = sadd.s32 %s581, %s582
          %s584 = smul.addr %s583, 8
          %s585 = scalar_lea.vmem %s3, %s584
        $region60: #{_ptjpeg_jit.4} parent=55 // pred_fallthru
          _
        // Predicated region
        $region61: #{_ptjpeg_jit.4} parent=55 // pred_check
          %p586 = pneg %p156
        $region62: #{_ptjpeg_jit.4} parent=55 // pred_check_branch
          %588 = sbr.rel (%p586) target = $region64
        $region63: #{_ptjpeg_jit.4} parent=55 // pred_region
          %s589 = smul.u32 2, %s27
          %p590 = scmp.lt.s32.totalorder %s26, 1
          %s591 = scalar_select %p590, %s26, 1
          %p592 = scmp.lt.s32.totalorder %s589, 1
          %s593 = scalar_select %p592, %s589, 1
          %s594 = smul.addr %s591, 4
          %s595 = sadd.s32 %s593, %s594
          %s596 = smul.addr %s595, 8
          %s597 = scalar_lea.vmem %s4, %s596
        $region64: #{_ptjpeg_jit.4} parent=55 // pred_fallthru
          _
      $region56: #{_ptjpeg_jit.4} parent=5 // pred_fallthru
        _
    $region6: #{_ptjpeg_jit.4} parent=1 // loop_footer
      %s19 = sadd.s32 1, %s15
    $region7: #{_ptjpeg_jit.4} parent=1 // loop_footer_branch
      %14 = sbr.rel target = $region3
    $region8: #{_ptjpeg_jit.4} parent=1 // loop_exit
      _
    %598 = vsyncpa [#allocation3], 1
    %s599 = scalar_lea.sflag [#allocation3], 1
    %600 = vsyncpa %s599, 1
    %601 = vsyncpa [#allocation5], 1

// kernel: _ptjpeg_jit.5
$region0: #{_ptjpeg_jit.5}
  #allocation0 [shape = 'u32[]', space=smem, size = 0x4, offset = 0x4, fixed_abs, tag = 'smem constant byte address 0x4 - core index']
  #allocation1 [shape = 'u32[72,128]{1,0:T(1,128)}', space=vmem, size = 0x9000, scoped, tag = 'internal scratch']
  %s0 = inlined_call_operand.vmem [shape: f32[16,128], index: 0, kind: input, shape index: {}]
  %s1 = inlined_call_operand.vmem [shape: f32[128,128], index: 1, kind: input, shape index: {}]
  %s2 = inlined_call_operand.vmem [shape: f32[128,128], index: 2, kind: input, shape index: {}]
  %s3 = inlined_call_operand.vmem [shape: f32[16,128], index: 3, kind: output, shape index: {}]
  %s4 = sld [smem:[#allocation0]]
  $region45: #{_ptjpeg_jit.5} parent=0
    _
  %s6 = ssub.s32 1, %s4
  %s7 = scalar_select 0, %s6, %s4
  loop: start=0, step=1, limit=4
  $region2: #{_ptjpeg_jit.5} parent=0 // loop_pre_header
    _
  $region3: #{_ptjpeg_jit.5} parent=0 // loop_header
    %s9 = sphi 0, %s13
    %p10 = scmp.ge.s32.totalorder %s9, 4
    %s19 = sphi 0, %s21
    %s22 = sphi 0, %s19
    %s23 = sphi 0, %s22
    %s39 = sphi 0, %s23
    %s43 = sphi 0, %s43
    %s45 = sphi 0, %s43
    %s46 = sphi 0, %s45
    %s60 = sphi 0, %s46
    %s64 = sphi 0, %s64
    %s66 = sphi 0, %s64
    %s67 = sphi 0, %s66
    %s81 = sphi 0, %s67
    %s87 = sphi 0, %s89
    %s90 = sphi 0, %s87
    %s91 = sphi 0, %s90
    %s107 = sphi 0, %s91
  $region4: #{_ptjpeg_jit.5} parent=0 // loop_header_branch
    %12 = sbr.rel (%p10) target = $region8
  $region5: #{_ptjpeg_jit.5} parent=0 // loop_body
    %s14 = ssub.s32 %s9, 1
    %s15 = ssub.s32 %s9, 2
    %s16 = sadd.s32 %s9, 1
    %s17 = ssub.s32 %s9, %s16
    %p18 = scmp.eq.s32.totalorder %s17, 0
    %s20 = sadd.s32 %s19, 1
    %s21 = scalar_select %p18, %s19, %s20
    %p24 = pneg %p18
    %p25 = scmp.eq.s32.totalorder %s9, 1
    %p26 = por %p24, %p25
    %p27 = scmp.ne.s32.totalorder %s19, %s22
    %p28 = scmp.eq.s32.totalorder %s9, 0
    %p29 = por %p27, %p28
    %p30 = scmp.ne.s32.totalorder %s19, %s22
    %p31 = scmp.eq.s32.totalorder %s14, 1
    %p32 = por %p30, %p31
    %p33 = scmp.ne.s32.totalorder %s22, %s23
    %p34 = scmp.eq.s32.totalorder %s14, 0
    %p35 = por %p33, %p34
    %p36 = scmp.ne.s32.totalorder %s22, %s23
    %p37 = scmp.eq.s32.totalorder %s15, 1
    %p38 = por %p36, %p37
    %p40 = scmp.ne.s32.totalorder %s23, %s39
    %p41 = scmp.eq.s32.totalorder %s15, 0
    %p42 = por %p40, %p41
    %s44 = sadd.s32 %s43, 1
    %p47 = scmp.eq.s32.totalorder %s9, 1
    %p48 = scmp.ne.s32.totalorder %s43, %s45
    %p49 = scmp.eq.s32.totalorder %s9, 0
    %p50 = por %p48, %p49
    %p51 = scmp.ne.s32.totalorder %s43, %s45
    %p52 = scmp.eq.s32.totalorder %s14, 1
    %p53 = por %p51, %p52
    %p54 = scmp.ne.s32.totalorder %s45, %s46
    %p55 = scmp.eq.s32.totalorder %s14, 0
    %p56 = por %p54, %p55
    %p57 = scmp.ne.s32.totalorder %s45, %s46
    %p58 = scmp.eq.s32.totalorder %s15, 1
    %p59 = por %p57, %p58
    %p61 = scmp.ne.s32.totalorder %s46, %s60
    %p62 = scmp.eq.s32.totalorder %s15, 0
    %p63 = por %p61, %p62
    %s65 = sadd.s32 %s64, 1
    %p68 = scmp.eq.s32.totalorder %s9, 1
    %p69 = scmp.ne.s32.totalorder %s64, %s66
    %p70 = scmp.eq.s32.totalorder %s9, 0
    %p71 = por %p69, %p70
    %p72 = scmp.ne.s32.totalorder %s64, %s66
    %p73 = scmp.eq.s32.totalorder %s14, 1
    %p74 = por %p72, %p73
    %p75 = scmp.ne.s32.totalorder %s66, %s67
    %p76 = scmp.eq.s32.totalorder %s14, 0
    %p77 = por %p75, %p76
    %p78 = scmp.ne.s32.totalorder %s66, %s67
    %p79 = scmp.eq.s32.totalorder %s15, 1
    %p80 = por %p78, %p79
    %p82 = scmp.ne.s32.totalorder %s67, %s81
    %p83 = scmp.eq.s32.totalorder %s15, 0
    %p84 = por %p82, %p83
    %s85 = ssub.s32 %s9, %s16
    %p86 = scmp.eq.s32.totalorder %s85, 0
    %s88 = sadd.s32 %s87, 1
    %s89 = scalar_select %p86, %s87, %s88
    %p92 = pneg %p86
    %p93 = scmp.eq.s32.totalorder %s9, 1
    %p94 = por %p92, %p93
    %p95 = scmp.ne.s32.totalorder %s87, %s90
    %p96 = scmp.eq.s32.totalorder %s9, 0
    %p97 = por %p95, %p96
    %p98 = scmp.ne.s32.totalorder %s87, %s90
    %p99 = scmp.eq.s32.totalorder %s14, 1
    %p100 = por %p98, %p99
    %p101 = scmp.ne.s32.totalorder %s90, %s91
    %p102 = scmp.eq.s32.totalorder %s14, 0
    %p103 = por %p101, %p102
    %p104 = scmp.ne.s32.totalorder %s90, %s91
    %p105 = scmp.eq.s32.totalorder %s15, 1
    %p106 = por %p104, %p105
    %p108 = scmp.ne.s32.totalorder %s91, %s107
    %p109 = scmp.eq.s32.totalorder %s15, 0
    %p110 = por %p108, %p109
    %p111 = scmp.le.s32.totalorder 1, %s9
    %p112 = scmp.lt.s32.totalorder %s9, 3
    %p113 = pnand %p111, %p112
    %p114 = pneg %p113
    // Predicated region
    $region9: #{_ptjpeg_jit.5} parent=5 // pred_check
      _
    $region10: #{_ptjpeg_jit.5} parent=5 // pred_check_branch
      %116 = sbr.rel (%p113) target = $region12
    $region11: #{_ptjpeg_jit.5} parent=5 // pred_region
      %s117 = ssub.s32 %s9, 1
      // Predicated region
      $region13: #{_ptjpeg_jit.5} parent=11 // pred_check
        %p118 = pneg %p56
      $region14: #{_ptjpeg_jit.5} parent=11 // pred_check_branch
        %120 = sbr.rel (%p118) target = $region16
      $region15: #{_ptjpeg_jit.5} parent=11 // pred_region
        _
      $region16: #{_ptjpeg_jit.5} parent=11 // pred_fallthru
        _
      // Predicated region
      $region17: #{_ptjpeg_jit.5} parent=11 // pred_check
        %p121 = pneg %p77
      $region18: #{_ptjpeg_jit.5} parent=11 // pred_check_branch
        %123 = sbr.rel (%p121) target = $region20
      $region19: #{_ptjpeg_jit.5} parent=11 // pred_region
        _
      $region20: #{_ptjpeg_jit.5} parent=11 // pred_fallthru
        _
    $region12: #{_ptjpeg_jit.5} parent=5 // pred_fallthru
      _
    %p124 = scmp.lt.s32.totalorder %s9, 2
    // Predicated region
    $region21: #{_ptjpeg_jit.5} parent=5 // pred_check
      %p125 = pneg %p124
    $region22: #{_ptjpeg_jit.5} parent=5 // pred_check_branch
      %127 = sbr.rel (%p125) target = $region24
    $region23: #{_ptjpeg_jit.5} parent=5 // pred_region
      // Predicated region
      $region25: #{_ptjpeg_jit.5} parent=23 // pred_check
        %p128 = pneg %p29
      $region26: #{_ptjpeg_jit.5} parent=23 // pred_check_branch
        %130 = sbr.rel (%p128) target = $region28
      $region27: #{_ptjpeg_jit.5} parent=23 // pred_region
        %p131 = scmp.lt.s32.totalorder %s9, 1
        %s132 = scalar_select %p131, %s9, 1
        %s133 = smul.addr %s132, 8
        %s134 = scalar_lea.vmem %s0, %s133
      $region28: #{_ptjpeg_jit.5} parent=23 // pred_fallthru
        _
    $region24: #{_ptjpeg_jit.5} parent=5 // pred_fallthru
      _
    %p135 = scmp.le.s32.totalorder 1, %s9
    %p136 = scmp.lt.s32.totalorder %s9, 3
    %p137 = pnand %p135, %p136
    %p138 = pneg %p137
    // Predicated region
    $region29: #{_ptjpeg_jit.5} parent=5 // pred_check
      _
    $region30: #{_ptjpeg_jit.5} parent=5 // pred_check_branch
      %140 = sbr.rel (%p137) target = $region32
    $region31: #{_ptjpeg_jit.5} parent=5 // pred_region
      %s141 = ssub.s32 %s9, 1
      %p142 = scmp.lt.s32.totalorder %s14, 1
      %s143 = scalar_select %p142, %s14, 1
      %s144 = smul.addr %s143, 8
      %s145 = scalar_lea.vmem %s0, %s144
      %p146 = pneg %p35
      %p147 = pneg %p32
      %p148 = pneg %p56
      %p149 = pneg %p53
      %p150 = pneg %p77
      %p151 = pneg %p74
      %p152 = pneg %p103
      %p153 = pneg %p100
      %p154 = scmp.lt.s32.totalorder %s14, 1
      %s155 = scalar_select %p154, %s14, 1
      %s156 = smul.addr %s155, 8
      %s157 = scalar_lea.vmem %s3, %s156
      %p158 = scmp.lt.s32.totalorder %s14, 1
      %s159 = scalar_select %p158, %s14, 1
      %s160 = smul.addr %s159, 8
      %s161 = scalar_lea.vmem %s0, %s160
      %p162 = scmp.lt.s32.totalorder %s14, 1
      %s163 = scalar_select %p162, %s14, 1
      %s164 = smul.addr %s163, 8
      %s165 = scalar_lea.vmem %s3, %s164
      %v166 = vld [vmem:[%s161] sm:$0xff]
      %v167 = vld [vmem:[%s1] sm:$0xff]
      %v168 = vld [vmem:[%s1 + $0x8] sm:$0xff]
      %v169 = vld [vmem:[%s1 + $0x10] sm:$0xff]
      %v170 = vld [vmem:[%s1 + $0x18] sm:$0xff]
      %v171 = vld [vmem:[%s1 + $0x20] sm:$0xff]
      %v172 = vld [vmem:[%s1 + $0x28] sm:$0xff]
      %v173 = vld [vmem:[%s1 + $0x30] sm:$0xff]
      %v174 = vld [vmem:[%s1 + $0x38] sm:$0xff]
      %v175 = vld [vmem:[%s1 + $0x40] sm:$0xff]
      %v176 = vld [vmem:[%s1 + $0x48] sm:$0xff]
      %v177 = vld [vmem:[%s1 + $0x50] sm:$0xff]
      %v178 = vld [vmem:[%s1 + $0x58] sm:$0xff]
      %v179 = vld [vmem:[%s1 + $0x60] sm:$0xff]
      %v180 = vld [vmem:[%s1 + $0x68] sm:$0xff]
      %v181 = vld [vmem:[%s1 + $0x70] sm:$0xff]
      %v182 = vld [vmem:[%s1 + $0x78] sm:$0xff]
      %183 = vmatpush.msra.mxu0 %v182
      %184 = vmatpush.msra.mxu0 %v181
      %185 = vmatpush.msra.mxu0 %v180
      %186 = vmatpush.msra.mxu0 %v179
      %187 = vmatpush.msra.mxu0 %v178
      %188 = vmatpush.msra.mxu0 %v177
      %189 = vmatpush.msra.mxu0 %v176
      %190 = vmatpush.msra.mxu0 %v175
      %191 = vmatpush.msra.mxu0 %v174
      %192 = vmatpush.msra.mxu0 %v173
      %193 = vmatpush.msra.mxu0 %v172
      %194 = vmatpush.msra.mxu0 %v171
      %195 = vmatpush.msra.mxu0 %v170
      %196 = vmatpush.msra.mxu0 %v169
      %197 = vmatpush.msra.mxu0 %v168
      %198 = vmatpush.msra.mxu0 %v167
      %199 = vmatmul.f32.gmra.mxu0 %v166
      %v200 = vpop.f32.mrf.mxu0
      %v201 = vadd.f32 0.0, %v200
      %202 = vdwg.mxu0
      %v203 = vround.ne.pseudo %v201
      %v204 = vld [vmem:[%s2] sm:$0xff]
      %v205 = vld [vmem:[%s2 + $0x8] sm:$0xff]
      %v206 = vld [vmem:[%s2 + $0x10] sm:$0xff]
      %v207 = vld [vmem:[%s2 + $0x18] sm:$0xff]
      %v208 = vld [vmem:[%s2 + $0x20] sm:$0xff]
      %v209 = vld [vmem:[%s2 + $0x28] sm:$0xff]
      %v210 = vld [vmem:[%s2 + $0x30] sm:$0xff]
      %v211 = vld [vmem:[%s2 + $0x38] sm:$0xff]
      %v212 = vld [vmem:[%s2 + $0x40] sm:$0xff]
      %v213 = vld [vmem:[%s2 + $0x48] sm:$0xff]
      %v214 = vld [vmem:[%s2 + $0x50] sm:$0xff]
      %v215 = vld [vmem:[%s2 + $0x58] sm:$0xff]
      %v216 = vld [vmem:[%s2 + $0x60] sm:$0xff]
      %v217 = vld [vmem:[%s2 + $0x68] sm:$0xff]
      %v218 = vld [vmem:[%s2 + $0x70] sm:$0xff]
      %v219 = vld [vmem:[%s2 + $0x78] sm:$0xff]
      %220 = vmatpush.msra.mxu0 %v219
      %221 = vmatpush.msra.mxu0 %v218
      %222 = vmatpush.msra.mxu0 %v217
      %223 = vmatpush.msra.mxu0 %v216
      %224 = vmatpush.msra.mxu0 %v215
      %225 = vmatpush.msra.mxu0 %v214
      %226 = vmatpush.msra.mxu0 %v213
      %227 = vmatpush.msra.mxu0 %v212
      %228 = vmatpush.msra.mxu0 %v211
      %229 = vmatpush.msra.mxu0 %v210
      %230 = vmatpush.msra.mxu0 %v209
      %231 = vmatpush.msra.mxu0 %v208
      %232 = vmatpush.msra.mxu0 %v207
      %233 = vmatpush.msra.mxu0 %v206
      %234 = vmatpush.msra.mxu0 %v205
      %235 = vmatpush.msra.mxu0 %v204
      %236 = vmatmul.f32.gmra.mxu0 %v203
      %v237 = vpop.f32.mrf.mxu0
      %v238 = vadd.f32 0.0, %v237
      %239 = vdwg.mxu0
      %240 = vst [vmem:[%s165] sm:$0xff] %v238
      %p241 = scmp.lt.s32.totalorder %s14, 1
      %s242 = scalar_select %p241, %s14, 1
      %s243 = smul.addr %s242, 8
      %s244 = scalar_lea.vmem %s3, %s243
      // Predicated region
      $region33: #{_ptjpeg_jit.5} parent=31 // pred_check
        %p245 = pneg %p100
      $region34: #{_ptjpeg_jit.5} parent=31 // pred_check_branch
        %247 = sbr.rel (%p245) target = $region36
      $region35: #{_ptjpeg_jit.5} parent=31 // pred_region
        _
      $region36: #{_ptjpeg_jit.5} parent=31 // pred_fallthru
        _
    $region32: #{_ptjpeg_jit.5} parent=5 // pred_fallthru
      _
    %p248 = scmp.le.s32.totalorder 2, %s9
    // Predicated region
    $region37: #{_ptjpeg_jit.5} parent=5 // pred_check
      %p249 = pneg %p248
    $region38: #{_ptjpeg_jit.5} parent=5 // pred_check_branch
      %251 = sbr.rel (%p249) target = $region40
    $region39: #{_ptjpeg_jit.5} parent=5 // pred_region
      %s252 = ssub.s32 %s9, 2
      // Predicated region
      $region41: #{_ptjpeg_jit.5} parent=39 // pred_check
        %p253 = pneg %p106
      $region42: #{_ptjpeg_jit.5} parent=39 // pred_check_branch
        %255 = sbr.rel (%p253) target = $region44
      $region43: #{_ptjpeg_jit.5} parent=39 // pred_region
        %p256 = scmp.lt.s32.totalorder %s15, 1
        %s257 = scalar_select %p256, %s15, 1
        %s258 = smul.addr %s257, 8
        %s259 = scalar_lea.vmem %s3, %s258
      $region44: #{_ptjpeg_jit.5} parent=39 // pred_fallthru
        _
    $region40: #{_ptjpeg_jit.5} parent=5 // pred_fallthru
      _
  $region6: #{_ptjpeg_jit.5} parent=0 // loop_footer
    %s13 = sadd.s32 1, %s9
  $region7: #{_ptjpeg_jit.5} parent=0 // loop_footer_branch
    %8 = sbr.rel target = $region3
  $region8: #{_ptjpeg_jit.5} parent=0 // loop_exit
    _

// kernel: _ptjpeg_jit.7
$region0: #{_ptjpeg_jit.7}
  #allocation0 [shape = 'u32[]', space=smem, size = 0x4, offset = 0x4, fixed_abs, tag = 'smem constant byte address 0x4 - core index']
  #allocation1 [shape = 'u32[72,128]{1,0:T(1,128)}', space=vmem, size = 0x9000, scoped, tag = 'internal scratch']
  %s0 = inlined_call_operand.vmem [shape: f32[2,32,32], index: 0, kind: input, shape index: {}]
  %s1 = inlined_call_operand.vmem [shape: f32[2,2,16,16], index: 1, kind: input, shape index: {}]
  %s2 = inlined_call_operand.vmem [shape: f32[32,16], index: 2, kind: input, shape index: {}]
  %s3 = inlined_call_operand.vmem [shape: f32[16,32], index: 3, kind: input, shape index: {}]
  %s4 = inlined_call_operand.hbm [shape: f32[2,3,32,32], index: 4, kind: output, shape index: {}]
  %s5 = sld [smem:[#allocation0]]
  $region49: #{_ptjpeg_jit.7} parent=0
    _
  %s7 = ssub.s32 1, %s5
  %s8 = scalar_select 0, %s7, %s5
  $region1: #{_ptjpeg_jit.7} parent=0
    #allocation2 [shape = 'u8[98304]{0}', space=vmem, size = 0x18000, scoped, tag = 'output window, operand 0']
    #allocation3 [shape = 's32[2]{0}', space=sflag, size = 0x8, scoped, tag = 'scoped memory for _ptjpeg_jit.7']
    %9 = vsyncpa [#allocation3], 0
    %s10 = scalar_lea.sflag [#allocation3], 1
    %11 = vsyncpa %s10, 0
    loop: start=0, step=1, limit=4
    $region2: #{_ptjpeg_jit.7} parent=1 // loop_pre_header
      _
    $region3: #{_ptjpeg_jit.7} parent=1 // loop_header
      %s13 = sphi 0, %s17
      %p14 = scmp.ge.s32.totalorder %s13, 4
      %s20 = sphi 0, %s32
      %s21 = sphi 0, %s28
      %s22 = sphi 0, %s20
      %s23 = sphi 0, %s21
      %s24 = sphi 0, %s22
      %s25 = sphi 0, %s23
      %s37 = sphi 0, %s39
      %s40 = sphi 0, %s37
      %s41 = sphi 0, %s40
      %s57 = sphi 0, %s41
      %s65 = sphi 0, %s67
      %s68 = sphi 0, %s65
      %s69 = sphi 0, %s68
      %s85 = sphi 0, %s69
      %s89 = sphi 0, %s89
      %s91 = sphi 0, %s89
      %s92 = sphi 0, %s91
      %s106 = sphi 0, %s92
      %s110 = sphi 0, %s110
      %s112 = sphi 0, %s110
      %s113 = sphi 0, %s112
      %s127 = sphi 0, %s113
      %s135 = sphi 0, %s137
      %s138 = sphi 0, %s135
      %s139 = sphi 0, %s138
      %s155 = sphi 0, %s139
    $region4: #{_ptjpeg_jit.7} parent=1 // loop_header_branch
      %16 = sbr.rel (%p14) target = $region8
    $region5: #{_ptjpeg_jit.7} parent=1 // loop_body
      %s18 = ssub.s32 %s13, 1
      %s19 = ssub.s32 %s13, 2
      %s26 = sadd.s32 1, %s21
      %p27 = scmp.ge.s32.totalorder %s26, 1
      %s28 = scalar_select %p27, 0, %s26
      %s29 = sadd.s32 1, %s20
      %s30 = scalar_select %p27, %s29, %s20
      %p31 = scmp.ge.s32.totalorder %s30, 2
      %s32 = scalar_select %p31, 0, %s30
      %s33 = ssub.s32 %s20, %s32
      %s34 = ssub.s32 %s21, %s28
      %s35 = sor.u32 %s33, %s34
      %p36 = scmp.eq.s32.totalorder %s35, 0
      %s38 = sadd.s32 %s37, 1
      %s39 = scalar_select %p36, %s37, %s38
      %p42 = pneg %p36
      %p43 = scmp.eq.s32.totalorder %s13, 1
      %p44 = por %p42, %p43
      %p45 = scmp.ne.s32.totalorder %s37, %s40
      %p46 = scmp.eq.s32.totalorder %s13, 0
      %p47 = por %p45, %p46
      %p48 = scmp.ne.s32.totalorder %s37, %s40
      %p49 = scmp.eq.s32.totalorder %s18, 1
      %p50 = por %p48, %p49
      %p51 = scmp.ne.s32.totalorder %s40, %s41
      %p52 = scmp.eq.s32.totalorder %s18, 0
      %p53 = por %p51, %p52
      %p54 = scmp.ne.s32.totalorder %s40, %s41
      %p55 = scmp.eq.s32.totalorder %s19, 1
      %p56 = por %p54, %p55
      %p58 = scmp.ne.s32.totalorder %s41, %s57
      %p59 = scmp.eq.s32.totalorder %s19, 0
      %p60 = por %p58, %p59
      %s61 = ssub.s32 %s20, %s32
      %s62 = ssub.s32 %s21, %s28
      %s63 = sor.u32 %s61, %s62
      %p64 = scmp.eq.s32.totalorder %s63, 0
      %s66 = sadd.s32 %s65, 1
      %s67 = scalar_select %p64, %s65, %s66
      %p70 = pneg %p64
      %p71 = scmp.eq.s32.totalorder %s13, 1
      %p72 = por %p70, %p71
      %p73 = scmp.ne.s32.totalorder %s65, %s68
      %p74 = scmp.eq.s32.totalorder %s13, 0
      %p75 = por %p73, %p74
      %p76 = scmp.ne.s32.totalorder %s65, %s68
      %p77 = scmp.eq.s32.totalorder %s18, 1
      %p78 = por %p76, %p77
      %p79 = scmp.ne.s32.totalorder %s68, %s69
      %p80 = scmp.eq.s32.totalorder %s18, 0
      %p81 = por %p79, %p80
      %p82 = scmp.ne.s32.totalorder %s68, %s69
      %p83 = scmp.eq.s32.totalorder %s19, 1
      %p84 = por %p82, %p83
      %p86 = scmp.ne.s32.totalorder %s69, %s85
      %p87 = scmp.eq.s32.totalorder %s19, 0
      %p88 = por %p86, %p87
      %s90 = sadd.s32 %s89, 1
      %p93 = scmp.eq.s32.totalorder %s13, 1
      %p94 = scmp.ne.s32.totalorder %s89, %s91
      %p95 = scmp.eq.s32.totalorder %s13, 0
      %p96 = por %p94, %p95
      %p97 = scmp.ne.s32.totalorder %s89, %s91
      %p98 = scmp.eq.s32.totalorder %s18, 1
      %p99 = por %p97, %p98
      %p100 = scmp.ne.s32.totalorder %s91, %s92
      %p101 = scmp.eq.s32.totalorder %s18, 0
      %p102 = por %p100, %p101
      %p103 = scmp.ne.s32.totalorder %s91, %s92
      %p104 = scmp.eq.s32.totalorder %s19, 1
      %p105 = por %p103, %p104
      %p107 = scmp.ne.s32.totalorder %s92, %s106
      %p108 = scmp.eq.s32.totalorder %s19, 0
      %p109 = por %p107, %p108
      %s111 = sadd.s32 %s110, 1
      %p114 = scmp.eq.s32.totalorder %s13, 1
      %p115 = scmp.ne.s32.totalorder %s110, %s112
      %p116 = scmp.eq.s32.totalorder %s13, 0
      %p117 = por %p115, %p116
      %p118 = scmp.ne.s32.totalorder %s110, %s112
      %p119 = scmp.eq.s32.totalorder %s18, 1
      %p120 = por %p118, %p119
      %p121 = scmp.ne.s32.totalorder %s112, %s113
      %p122 = scmp.eq.s32.totalorder %s18, 0
      %p123 = por %p121, %p122
      %p124 = scmp.ne.s32.totalorder %s112, %s113
      %p125 = scmp.eq.s32.totalorder %s19, 1
      %p126 = por %p124, %p125
      %p128 = scmp.ne.s32.totalorder %s113, %s127
      %p129 = scmp.eq.s32.totalorder %s19, 0
      %p130 = por %p128, %p129
      %s131 = ssub.s32 %s20, %s32
      %s132 = ssub.s32 %s21, %s28
      %s133 = sor.u32 %s131, %s132
      %p134 = scmp.eq.s32.totalorder %s133, 0
      %s136 = sadd.s32 %s135, 1
      %s137 = scalar_select %p134, %s135, %s136
      %p140 = pneg %p134
      %p141 = scmp.eq.s32.totalorder %s13, 1
      %p142 = por %p140, %p141
      %p143 = scmp.ne.s32.totalorder %s135, %s138
      %p144 = scmp.eq.s32.totalorder %s13, 0
      %p145 = por %p143, %p144
      %p146 = scmp.ne.s32.totalorder %s135, %s138
      %p147 = scmp.eq.s32.totalorder %s18, 1
      %p148 = por %p146, %p147
      %p149 = scmp.ne.s32.totalorder %s138, %s139
      %p150 = scmp.eq.s32.totalorder %s18, 0
      %p151 = por %p149, %p150
      %p152 = scmp.ne.s32.totalorder %s138, %s139
      %p153 = scmp.eq.s32.totalorder %s19, 1
      %p154 = por %p152, %p153
      %p156 = scmp.ne.s32.totalorder %s139, %s155
      %p157 = scmp.eq.s32.totalorder %s19, 0
      %p158 = por %p156, %p157
      %p159 = scmp.le.s32.totalorder 1, %s13
      %p160 = scmp.lt.s32.totalorder %s13, 3
      %p161 = pnand %p159, %p160
      %p162 = pneg %p161
      // Predicated region
      $region9: #{_ptjpeg_jit.7} parent=5 // pred_check
        _
      $region10: #{_ptjpeg_jit.7} parent=5 // pred_check_branch
        %164 = sbr.rel (%p161) target = $region12
      $region11: #{_ptjpeg_jit.7} parent=5 // pred_region
        %s165 = ssub.s32 %s13, 1
        // Predicated region
        $region13: #{_ptjpeg_jit.7} parent=11 // pred_check
          %p166 = pneg %p102
        $region14: #{_ptjpeg_jit.7} parent=11 // pred_check_branch
          %168 = sbr.rel (%p166) target = $region16
        $region15: #{_ptjpeg_jit.7} parent=11 // pred_region
          _
        $region16: #{_ptjpeg_jit.7} parent=11 // pred_fallthru
          _
        // Predicated region
        $region17: #{_ptjpeg_jit.7} parent=11 // pred_check
          %p169 = pneg %p123
        $region18: #{_ptjpeg_jit.7} parent=11 // pred_check_branch
          %171 = sbr.rel (%p169) target = $region20
        $region19: #{_ptjpeg_jit.7} parent=11 // pred_region
          _
        $region20: #{_ptjpeg_jit.7} parent=11 // pred_fallthru
          _
      $region12: #{_ptjpeg_jit.7} parent=5 // pred_fallthru
        _
      %p172 = scmp.lt.s32.totalorder %s13, 2
      // Predicated region
      $region21: #{_ptjpeg_jit.7} parent=5 // pred_check
        %p173 = pneg %p172
      $region22: #{_ptjpeg_jit.7} parent=5 // pred_check_branch
        %175 = sbr.rel (%p173) target = $region24
      $region23: #{_ptjpeg_jit.7} parent=5 // pred_region
        // Predicated region
        $region25: #{_ptjpeg_jit.7} parent=23 // pred_check
          %p176 = pneg %p47
        $region26: #{_ptjpeg_jit.7} parent=23 // pred_check_branch
          %178 = sbr.rel (%p176) target = $region28
        $region27: #{_ptjpeg_jit.7} parent=23 // pred_region
          %s179 = smul.u32 4, %s21
          %p180 = scmp.lt.s32.totalorder %s20, 1
          %s181 = scalar_select %p180, %s20, 1
          %p182 = scmp.lt.s32.totalorder %s179, 3
          %s183 = scalar_select %p182, %s179, 3
          %s184 = smul.addr %s181, 4
          %s185 = sadd.s32 %s183, %s184
          %s186 = smul.addr %s185, 8
          %s187 = scalar_lea.vmem %s0, %s186
          %s188 = smul.u32 4, %s21
        $region28: #{_ptjpeg_jit.7} parent=23 // pred_fallthru
          _
        // Predicated region
        $region29: #{_ptjpeg_jit.7} parent=23 // pred_check
          %p189 = pneg %p75
        $region30: #{_ptjpeg_jit.7} parent=23 // pred_check_branch
          %191 = sbr.rel (%p189) target = $region32
        $region31: #{_ptjpeg_jit.7} parent=23 // pred_region
          %s192 = smul.u32 2, %s21
          %p193 = scmp.lt.s32.totalorder %s20, 1
          %s194 = scalar_select %p193, %s20, 1
          %p195 = scmp.lt.s32.totalorder %s192, 1
          %s196 = scalar_select %p195, %s192, 1
          %s197 = smul.addr %s194, 4
          %s198 = sadd.s32 %s196, %s197
          %s199 = smul.addr %s198, 8
          %s200 = scalar_lea.vmem %s1, %s199
          %s201 = smul.u32 2, %s21
        $region32: #{_ptjpeg_jit.7} parent=23 // pred_fallthru
          _
      $region24: #{_ptjpeg_jit.7} parent=5 // pred_fallthru
        _
      %p202 = scmp.le.s32.totalorder 1, %s13
      %p203 = scmp.lt.s32.totalorder %s13, 3
      %p204 = pnand %p202, %p203
      %p205 = pneg %p204
      // Predicated region
      $region33: #{_ptjpeg_jit.7} parent=5 // pred_check
        _
      $region34: #{_ptjpeg_jit.7} parent=5 // pred_check_branch
        %207 = sbr.rel (%p204) target = $region36
      $region35: #{_ptjpeg_jit.7} parent=5 // pred_region
        %s208 = ssub.s32 %s13, 1
        %s209 = smul.u32 4, %s23
        %p210 = scmp.lt.s32.totalorder %s22, 1
        %s211 = scalar_select %p210, %s22, 1
        %p212 = scmp.lt.s32.totalorder %s209, 3
        %s213 = scalar_select %p212, %s209, 3
        %s214 = smul.addr %s211, 4
        %s215 = sadd.s32 %s213, %s214
        %s216 = smul.addr %s215, 8
        %s217 = scalar_lea.vmem %s0, %s216
        %p218 = pneg %p53
        %p219 = pneg %p50
        %s220 = smul.u32 2, %s23
        %p221 = scmp.lt.s32.totalorder %s22, 1
        %s222 = scalar_select %p221, %s22, 1
        %p223 = scmp.lt.s32.totalorder %s220, 1
        %s224 = scalar_select %p223, %s220, 1
        %s225 = smul.addr %s222, 4
        %s226 = sadd.s32 %s224, %s225
        %s227 = smul.addr %s226, 8
        %s228 = scalar_lea.vmem %s1, %s227
        %p229 = pneg %p81
        %p230 = pneg %p78
        %p231 = pneg %p102
        %p232 = pneg %p99
        %p233 = pneg %p123
        %p234 = pneg %p120
        %p235 = pneg %p151
        %p236 = pneg %p148
        %s237 = sand.u32 %s138, 1
        %s238 = scalar_lea.sflag [#allocation3], %s237
        %s239 = sand.u32 %s138, 1
        %s240 = smul.addr %s239, 96
        %s241 = scalar_lea.vmem [#allocation2], %s240
        %s242 = smul.u32 4, %s23
        %p243 = scmp.lt.s32.totalorder %s22, 1
        %s244 = scalar_select %p243, %s22, 1
        %p245 = scmp.lt.s32.totalorder %s242, 3
        %s246 = scalar_select %p245, %s242, 3
        %s247 = smul.addr %s244, 4
        %s248 = sadd.s32 %s246, %s247
        %s249 = smul.addr %s248, 8
        %s250 = scalar_lea.vmem %s0, %s249
        %s251 = smul.u32 4, %s23
        %s252 = smul.u32 2, %s23
        %p253 = scmp.lt.s32.totalorder %s22, 1
        %s254 = scalar_select %p253, %s22, 1
        %p255 = scmp.lt.s32.totalorder %s252, 1
        %s256 = scalar_select %p255, %s252, 1
        %s257 = smul.addr %s254, 4
        %s258 = sadd.s32 %s256, %s257
        %s259 = smul.addr %s258, 8
        %s260 = scalar_lea.vmem %s1, %s259
        %s261 = smul.u32 2, %s23
        %s262 = smul.u32 4, %s23
        %v263 = vld [vmem:[%s250] sm:$0xff]
        %v264 = vld [vmem:[%s250 + $0x8] sm:$0xff]
        %v265 = vld [vmem:[%s250 + $0x10] sm:$0xff]
        %v266 = vld [vmem:[%s250 + $0x18] sm:$0xff]
        %v267 = vadd.f32 %v263, 128.0
        %v268 = vadd.f32 %v264, 128.0
        %v269 = vadd.f32 %v265, 128.0
        %v270 = vadd.f32 %v266, 128.0
        %v271 = vld [vmem:[%s2] sm:$0xff]
        %v272 = vld [vmem:[%s2 + $0x8] sm:$0xff]
        %v273 = vld [vmem:[%s2 + $0x10] sm:$0xff]
        %v274 = vld [vmem:[%s2 + $0x18] sm:$0xff]
        %v275 = vld [vmem:[%s3] sm:$0xff]
        %v276 = vld [vmem:[%s3 + $0x8] sm:$0xff]
        %v277 = vld [vmem:[%s260] sm:$0xff]
        %v278 = vld [vmem:[%s260 + $0x8] sm:$0xff]
        %vm279 = vcmask 130048
        %v281 = vsel %vm279, %v277, 0
        %v284 = vsel %vm279, %v278, 0
        %286 = vmatpush.msra.mxu0 0.0
        %287 = vmatpush.msra.mxu0 0.0
        %288 = vmatpush.msra.mxu0 0.0
        %289 = vmatpush.msra.mxu0 0.0
        %290 = vmatpush.msra.mxu0 0.0
        %291 = vmatpush.msra.mxu0 0.0
        %292 = vmatpush.msra.mxu0 0.0
        %293 = vmatpush.msra.mxu0 0.0
        %294 = vmatpush.msra.mxu0 0.0
        %295 = vmatpush.msra.mxu0 0.0
        %296 = vmatpush.msra.mxu0 0.0
        %297 = vmatpush.msra.mxu0 0.0
        %298 = vmatpush.msra.mxu0 0.0
        %299 = vmatpush.msra.mxu0 0.0
        %300 = vmatpush.msra.mxu0 %v276
        %301 = vmatpush.msra.mxu0 %v275
        %302 = vmatmul.f32.gmra.mxu0 %v281
        %v303 = vpop.f32.mrf.mxu0
        %v304 = vadd.f32 0.0, %v303
        %305 = vmatmul.f32.gmra.mxu0 %v284
        %v306 = vpop.f32.mrf.mxu0
        %v307 = vadd.f32 0.0, %v306
        %308 = vdwg.mxu0
        %v310 = vsel %vm279, %v271, 0
        %v313 = vsel %vm279, %v272, 0
        %v316 = vsel %vm279, %v273, 0
        %v319 = vsel %vm279, %v274, 0
        %321 = vmatpush.msra.mxu0 0.0
        %322 = vmatpush.msra.mxu0 0.0
        %323 = vmatpush.msra.mxu0 0.0
        %324 = vmatpush.msra.mxu0 0.0
        %325 = vmatpush.msra.mxu0 0.0
        %326 = vmatpush.msra.mxu0 0.0
        %327 = vmatpush.msra.mxu0 0.0
        %328 = vmatpush.msra.mxu0 0.0
        %329 = vmatpush.msra.mxu0 0.0
        %330 = vmatpush.msra.mxu0 0.0
        %331 = vmatpush.msra.mxu0 0.0
        %332 = vmatpush.msra.mxu0 0.0
        %333 = vmatpush.msra.mxu0 0.0
        %334 = vmatpush.msra.mxu0 0.0
        %335 = vmatpush.msra.mxu0 %v307
        %336 = vmatpush.msra.mxu0 %v304
        %337 = vmatmul.f32.gmra.mxu0 %v310
        %v338 = vpop.f32.mrf.mxu0
        %v339 = vadd.f32 0.0, %v338
        %340 = vmatmul.f32.gmra.mxu0 %v313
        %v341 = vpop.f32.mrf.mxu0
        %v342 = vadd.f32 0.0, %v341
        %343 = vmatmul.f32.gmra.mxu0 %v316
        %v344 = vpop.f32.mrf.mxu0
        %v345 = vadd.f32 0.0, %v344
        %346 = vmatmul.f32.gmra.mxu0 %v319
        %v347 = vpop.f32.mrf.mxu0
        %v348 = vadd.f32 0.0, %v347
        %349 = vdwg.mxu0
        %s350 = scalar_lea.vmem %s260, 16
        %v351 = vld [vmem:[%s350] sm:$0xff]
        %v352 = vld [vmem:[%s350 + $0x8] sm:$0xff]
        %v354 = vsel %vm279, %v351, 0
        %v357 = vsel %vm279, %v352, 0
        %359 = vmatpush.msra.mxu0 0.0
        %360 = vmatpush.msra.mxu0 0.0
        %361 = vmatpush.msra.mxu0 0.0
        %362 = vmatpush.msra.mxu0 0.0
        %363 = vmatpush.msra.mxu0 0.0
        %364 = vmatpush.msra.mxu0 0.0
        %365 = vmatpush.msra.mxu0 0.0
        %366 = vmatpush.msra.mxu0 0.0
        %367 = vmatpush.msra.mxu0 0.0
        %368 = vmatpush.msra.mxu0 0.0
        %369 = vmatpush.msra.mxu0 0.0
        %370 = vmatpush.msra.mxu0 0.0
        %371 = vmatpush.msra.mxu0 0.0
        %372 = vmatpush.msra.mxu0 0.0
        %373 = vmatpush.msra.mxu0 %v276
        %374 = vmatpush.msra.mxu0 %v275
        %375 = vmatmul.f32.gmra.mxu0 %v354
        %v376 = vpop.f32.mrf.mxu0
        %v377 = vadd.f32 0.0, %v376
        %378 = vmatmul.f32.gmra.mxu0 %v357
        %v379 = vpop.f32.mrf.mxu0
        %v380 = vadd.f32 0.0, %v379
        %381 = vdwg.mxu0
        %382 = vmatpush.msra.mxu0 0.0
        %383 = vmatpush.msra.mxu0 0.0
        %384 = vmatpush.msra.mxu0 0.0
        %385 = vmatpush.msra.mxu0 0.0
        %386 = vmatpush.msra.mxu0 0.0
        %387 = vmatpush.msra.mxu0 0.0
        %388 = vmatpush.msra.mxu0 0.0
        %389 = vmatpush.msra.mxu0 0.0
        %390 = vmatpush.msra.mxu0 0.0
        %391 = vmatpush.msra.mxu0 0.0
        %392 = vmatpush.msra.mxu0 0.0
        %393 = vmatpush.msra.mxu0 0.0
        %394 = vmatpush.msra.mxu0 0.0
        %395 = vmatpush.msra.mxu0 0.0
        %396 = vmatpush.msra.mxu0 %v380
        %397 = vmatpush.msra.mxu0 %v377
        %398 = vmatmul.f32.gmra.mxu0 %v310
        %v399 = vpop.f32.mrf.mxu0
        %v400 = vadd.f32 0.0, %v399
        %401 = vmatmul.f32.gmra.mxu0 %v313
        %v402 = vpop.f32.mrf.mxu0
        %v403 = vadd.f32 0.0, %v402
        %404 = vmatmul.f32.gmra.mxu0 %v316
        %v405 = vpop.f32.mrf.mxu0
        %v406 = vadd.f32 0.0, %v405
        %407 = vmatmul.f32.gmra.mxu0 %v319
        %v408 = vpop.f32.mrf.mxu0
        %v409 = vadd.f32 0.0, %v408
        %410 = vdwg.mxu0
        %v411 = vmul.f32 %v400, 1.402
        %v412 = vmul.f32 %v403, 1.402
        %v413 = vmul.f32 %v406, 1.402
        %v414 = vmul.f32 %v409, 1.402
        %v415 = vadd.f32 %v267, %v411
        %v416 = vadd.f32 %v268, %v412
        %v417 = vadd.f32 %v269, %v413
        %v418 = vadd.f32 %v270, %v414
        %v419 = vmul.f32 %v339, 0.344136
        %v420 = vmul.f32 %v342, 0.344136
        %v421 = vmul.f32 %v345, 0.344136
        %v422 = vmul.f32 %v348, 0.344136
        %v423 = vsub.f32 %v267, %v419
        %v424 = vsub.f32 %v268, %v420
        %v425 = vsub.f32 %v269, %v421
        %v426 = vsub.f32 %v270, %v422
        %v427 = vmul.f32 %v400, 0.714136
        %v428 = vmul.f32 %v403, 0.714136
        %v429 = vmul.f32 %v406, 0.714136
        %v430 = vmul.f32 %v409, 0.714136
        %v431 = vsub.f32 %v423, %v427
        %v432 = vsub.f32 %v424, %v428
        %v433 = vsub.f32 %v425, %v429
        %v434 = vsub.f32 %v426, %v430
        %v435 = vmul.f32 %v339, 1.772
        %v436 = vmul.f32 %v342, 1.772
        %v437 = vmul.f32 %v345, 1.772
        %v438 = vmul.f32 %v348, 1.772
        %v439 = vadd.f32 %v267, %v435
        %v440 = vadd.f32 %v268, %v436
        %v441 = vadd.f32 %v269, %v437
        %v442 = vadd.f32 %v270, %v438
        %v443 = vmax.f32 %v415, 0.0
        %v444 = vmax.f32 %v416, 0.0
        %v445 = vmax.f32 %v417, 0.0
        %v446 = vmax.f32 %v418, 0.0
        %v447 = vmin.f32 %v443, 255.0
        %v448 = vmin.f32 %v444, 255.0
        %v449 = vmin.f32 %v445, 255.0
        %v450 = vmin.f32 %v446, 255.0
        %v451 = vmul.f32 %v447, 0.003921569
        %v452 = vmul.f32 %v448, 0.003921569
        %v453 = vmul.f32 %v449, 0.003921569
        %v454 = vmul.f32 %v450, 0.003921569
        %vm455 = vcmask 261120
        %456 = vst.msk [vmem:[%s241] sm:$0xff] %vm455, %v451
        %457 = vst.msk [vmem:[%s241 + $0x8] sm:$0xff] %vm455, %v452
        %458 = vst.msk [vmem:[%s241 + $0x10] sm:$0xff] %vm455, %v453
        %459 = vst.msk [vmem:[%s241 + $0x18] sm:$0xff] %vm455, %v454
        %v460 = vmax.f32 %v431, 0.0
        %v461 = vmax.f32 %v432, 0.0
        %v462 = vmax.f32 %v433, 0.0
        %v463 = vmax.f32 %v434, 0.0
        %v464 = vmin.f32 %v460, 255.0
        %v465 = vmin.f32 %v461, 255.0
        %v466 = vmin.f32 %v462, 255.0
        %v467 = vmin.f32 %v463, 255.0
        %v468 = vmul.f32 %v464, 0.003921569
        %v469 = vmul.f32 %v465, 0.003921569
        %v470 = vmul.f32 %v466, 0.003921569
        %v471 = vmul.f32 %v467, 0.003921569
        %s472 = scalar_lea.vmem %s241, 32 [#allocation2]
        %473 = vst.msk [vmem:[%s472] sm:$0xff] %vm455, %v468
        %474 = vst.msk [vmem:[%s472 + $0x8] sm:$0xff] %vm455, %v469
        %475 = vst.msk [vmem:[%s472 + $0x10] sm:$0xff] %vm455, %v470
        %476 = vst.msk [vmem:[%s472 + $0x18] sm:$0xff] %vm455, %v471
        %v477 = vmax.f32 %v439, 0.0
        %v478 = vmax.f32 %v440, 0.0
        %v479 = vmax.f32 %v441, 0.0
        %v480 = vmax.f32 %v442, 0.0
        %v481 = vmin.f32 %v477, 255.0
        %v482 = vmin.f32 %v478, 255.0
        %v483 = vmin.f32 %v479, 255.0
        %v484 = vmin.f32 %v480, 255.0
        %v485 = vmul.f32 %v481, 0.003921569
        %v486 = vmul.f32 %v482, 0.003921569
        %v487 = vmul.f32 %v483, 0.003921569
        %v488 = vmul.f32 %v484, 0.003921569
        %s489 = scalar_lea.vmem %s241, 64 [#allocation2]
        %490 = vst.msk [vmem:[%s489] sm:$0xff] %vm455, %v485
        %491 = vst.msk [vmem:[%s489 + $0x8] sm:$0xff] %vm455, %v486
        %492 = vst.msk [vmem:[%s489 + $0x10] sm:$0xff] %vm455, %v487
        %493 = vst.msk [vmem:[%s489 + $0x18] sm:$0xff] %vm455, %v488
        %s494 = sand.u32 %s138, 1
        %s495 = scalar_lea.sflag [#allocation3], %s494
        %s496 = sand.u32 %s138, 1
        %s497 = smul.addr %s496, 96
        %s498 = scalar_lea.vmem [#allocation2], %s497
        // Predicated region
        $region37: #{_ptjpeg_jit.7} parent=35 // pred_check
          %p499 = pneg %p148
        $region38: #{_ptjpeg_jit.7} parent=35 // pred_check_branch
          %501 = sbr.rel (%p499) target = $region40
        $region39: #{_ptjpeg_jit.7} parent=35 // pred_region
          %s502 = smul.u32 4, %s23
          %504 = vsyncadd %s495, 0
          %s505 = smul.addr %s22, 12
          %s506 = sadd.s32 %s502, %s505
          %s507 = smul.addr %s506, 8
          %s508 = scalar_lea.hbm %s4, %s507
          %s509 = sshll.u32 %s498, 4
          %s510 = int_to_ptr.vmem [resolvable:$true] %s509
          %s511 = sshll.u32 %s508, 4
          %s512 = int_to_ptr.hbm [resolvable:$true] %s511
          %517 = dma.vmem_to_hbm [thread:$0]  %s510, 1536, %s512, %s495, 128, 128, 8
        $region40: #{_ptjpeg_jit.7} parent=35 // pred_fallthru
          _
      $region36: #{_ptjpeg_jit.7} parent=5 // pred_fallthru
        _
      %p518 = scmp.le.s32.totalorder 2, %s13
      // Predicated region
      $region41: #{_ptjpeg_jit.7} parent=5 // pred_check
        %p519 = pneg %p518
      $region42: #{_ptjpeg_jit.7} parent=5 // pred_check_branch
        %521 = sbr.rel (%p519) target = $region44
      $region43: #{_ptjpeg_jit.7} parent=5 // pred_region
        %s522 = ssub.s32 %s13, 2
        // Predicated region
        $region45: #{_ptjpeg_jit.7} parent=43 // pred_check
          %p523 = pneg %p154
        $region46: #{_ptjpeg_jit.7} parent=43 // pred_check_branch
          %525 = sbr.rel (%p523) target = $region48
        $region47: #{_ptjpeg_jit.7} parent=43 // pred_region
          %s526 = sand.u32 %s139, 1
          %s527 = scalar_lea.sflag [#allocation3], %s526
          %s528 = sand.u32 %s139, 1
          %s529 = smul.addr %s528, 96
          %s530 = scalar_lea.vmem [#allocation2], %s529
          %532 = dma.done %s527, 1536
        $region48: #{_ptjpeg_jit.7} parent=43 // pred_fallthru
          _
      $region44: #{_ptjpeg_jit.7} parent=5 // pred_fallthru
        _
    $region6: #{_ptjpeg_jit.7} parent=1 // loop_footer
      %s17 = sadd.s32 1, %s13
    $region7: #{_ptjpeg_jit.7} parent=1 // loop_footer_branch
      %12 = sbr.rel target = $region3
    $region8: #{_ptjpeg_jit.7} parent=1 // loop_exit
      _
    %533 = vsyncpa [#allocation3], 1
    %s534 = scalar_lea.sflag [#allocation3], 1
    %535 = vsyncpa %s534, 1

</llo_original>
